<compile_context>
chip_gen: v7x
topology: tpu7x:2x2x1
jax: 0.10.0
libtpu: 0.0.40
codegen_flags: <defaults>
</compile_context>

<pallas_src>
import functools
import math

import jax
import jax.numpy as jnp
from jax.experimental import pallas as pl
from jax.experimental.pallas import tpu as pltpu


# ---------------------------------------------------------------------------
# In-kernel helpers (operate on f32 VMEM values)
# ---------------------------------------------------------------------------

def _layernorm_f32(x, g, b, eps=1e-5):
    mean = jnp.mean(x, axis=-1, keepdims=True)
    var = jnp.mean((x - mean) ** 2, axis=-1, keepdims=True)
    return (x - mean) * jax.lax.rsqrt(var + eps) * g + b


def _mha_outproj_residual(ln_q, kv_in, wq, wk, wv, wo, bo, resid, n_heads, d_head):
    """Multi-head attention + output projection + bias + residual, all in VMEM (f32)."""
    scale = 1.0 / math.sqrt(d_head)
    # Fold the softmax scale into the (small) Q tile, not the (Nq, Nk) score tile.
    q = jnp.dot(ln_q, wq, preferred_element_type=jnp.float32) * scale
    k = jnp.dot(kv_in, wk, preferred_element_type=jnp.float32)
    v = jnp.dot(kv_in, wv, preferred_element_type=jnp.float32)

    acc = None
    for h in range(n_heads):           # static, small head count -> unrolled
        sl = slice(h * d_head, (h + 1) * d_head)
        # scores: q_h @ k_h^T via dot_general (no explicit transpose)
        s = jax.lax.dot_general(q[:, sl], k[:, sl], (((1,), (1,)), ((), ())),
                                preferred_element_type=jnp.float32)
        m = jnp.max(s, axis=-1, keepdims=True)
        p = jnp.exp(s - m)
        l = jnp.sum(p, axis=-1, keepdims=True)
        p = p * pl.reciprocal(l, approx=True)          # EUP slot, frees the VALU
        o_h = jnp.dot(p, v[:, sl], preferred_element_type=jnp.float32)
        # Fused head-merge + output projection: attn @ wo == sum_h o_h @ wo[rows_h]
        contrib = jnp.dot(o_h, wo[sl, :], preferred_element_type=jnp.float32)
        acc = contrib if acc is None else acc + contrib
    return acc + bo + resid


# ---------------------------------------------------------------------------
# Fused kernels (one per residual branch)
# ---------------------------------------------------------------------------

def _self_attn_block_kernel(x_ref, g_ref, b_ref, wq_ref, wk_ref, wv_ref,
                            wo_ref, bo_ref, o_ref, *, n_heads, d_head):
    x = x_ref[0].astype(jnp.float32)                        # (N, D) raw input = residual
    ln = _layernorm_f32(x, g_ref[...].astype(jnp.float32),
                        b_ref[...].astype(jnp.float32))
    out = _mha_outproj_residual(
        ln, ln,
        wq_ref[...].astype(jnp.float32), wk_ref[...].astype(jnp.float32),
        wv_ref[...].astype(jnp.float32), wo_ref[...].astype(jnp.float32),
        bo_ref[...].astype(jnp.float32), x, n_heads, d_head)
    o_ref[0] = out.astype(o_ref.dtype)


def _cross_attn_block_kernel(x_ref, ctx_ref, g_ref, b_ref, wq_ref, wk_ref, wv_ref,
                             wo_ref, bo_ref, o_ref, *, n_heads, d_head):
    x = x_ref[0].astype(jnp.float32)
    ctx = ctx_ref[0].astype(jnp.float32)
    ln = _layernorm_f32(x, g_ref[...].astype(jnp.float32),
                        b_ref[...].astype(jnp.float32))
    out = _mha_outproj_residual(
        ln, ctx,
        wq_ref[...].astype(jnp.float32), wk_ref[...].astype(jnp.float32),
        wv_ref[...].astype(jnp.float32), wo_ref[...].astype(jnp.float32),
        bo_ref[...].astype(jnp.float32), x, n_heads, d_head)
    o_ref[0] = out.astype(o_ref.dtype)


def _ff_block_kernel(x_ref, g_ref, b_ref, w1_ref, b1_ref, w2_ref, b2_ref, o_ref,
                     *, ff_inner):
    x = x_ref[0].astype(jnp.float32)
    ln = _layernorm_f32(x, g_ref[...].astype(jnp.float32),
                        b_ref[...].astype(jnp.float32))
    h = jnp.dot(ln, w1_ref[...].astype(jnp.float32),
                preferred_element_type=jnp.float32) + b1_ref[...].astype(jnp.float32)
    a, gate = h[:, :ff_inner], h[:, ff_inner:]              # GEGLU chunk inside kernel
    g_act = a * jax.nn.gelu(gate, approximate=False)        # exact (erf) GELU, f32
    out = jnp.dot(g_act, w2_ref[...].astype(jnp.float32),
                  preferred_element_type=jnp.float32)
    out = out + b2_ref[...].astype(jnp.float32) + x         # fused bias + residual
    o_ref[0] = out.astype(o_ref.dtype)


# ---------------------------------------------------------------------------
# pallas_call wrappers
# ---------------------------------------------------------------------------

_CPARAMS = pltpu.CompilerParams(
    dimension_semantics=("parallel",),          # batch axis -> shard across TCs
    vmem_limit_bytes=32 * 1024 * 1024,          # explicit, safe on v5e/v6e/v7x
)


def _const_spec(shape):
    zeros = (0,) * len(shape)
    return pl.BlockSpec(shape, lambda i, _z=zeros: _z)


def self_attn_block(x, gamma, beta, p, n_heads, d_head):
    B, N, D = x.shape
    inner = n_heads * d_head
    kernel = functools.partial(_self_attn_block_kernel, n_heads=n_heads, d_head=d_head)
    return pl.pallas_call(
        kernel,
        out_shape=jax.ShapeDtypeStruct((B, N, D), x.dtype),
        grid=(B,),
        in_specs=[
            pl.BlockSpec((1, N, D), lambda i: (i, 0, 0)),
            _const_spec((1, D)), _const_spec((1, D)),
            _const_spec((D, inner)), _const_spec((D, inner)), _const_spec((D, inner)),
            _const_spec((inner, D)), _const_spec((1, D)),
        ],
        out_specs=pl.BlockSpec((1, N, D), lambda i: (i, 0, 0)),
        compiler_params=_CPARAMS,
    )(x, gamma.reshape(1, -1), beta.reshape(1, -1),
      p["wq"], p["wk"], p["wv"], p["wo"], p["bo"].reshape(1, -1))


def cross_attn_block(x, context, gamma, beta, p, n_heads, d_head):
    B, N, D = x.shape
    M, Dc = context.shape[1], context.shape[2]
    inner = n_heads * d_head
    kernel = functools.partial(_cross_attn_block_kernel, n_heads=n_heads, d_head=d_head)
    return pl.pallas_call(
        kernel,
        out_shape=jax.ShapeDtypeStruct((B, N, D), x.dtype),
        grid=(B,),
        in_specs=[
            pl.BlockSpec((1, N, D), lambda i: (i, 0, 0)),
            pl.BlockSpec((1, M, Dc), lambda i: (i, 0, 0)),
            _const_spec((1, D)), _const_spec((1, D)),
            _const_spec((D, inner)), _const_spec((Dc, inner)), _const_spec((Dc, inner)),
            _const_spec((inner, D)), _const_spec((1, D)),
        ],
        out_specs=pl.BlockSpec((1, N, D), lambda i: (i, 0, 0)),
        compiler_params=_CPARAMS,
    )(x, context, gamma.reshape(1, -1), beta.reshape(1, -1),
      p["wq"], p["wk"], p["wv"], p["wo"], p["bo"].reshape(1, -1))


def ff_block(x, gamma, beta, p):
    B, N, D = x.shape
    ff_inner = p["w2"].shape[0]
    kernel = functools.partial(_ff_block_kernel, ff_inner=ff_inner)
    return pl.pallas_call(
        kernel,
        out_shape=jax.ShapeDtypeStruct((B, N, D), x.dtype),
        grid=(B,),
        in_specs=[
            pl.BlockSpec((1, N, D), lambda i: (i, 0, 0)),
            _const_spec((1, D)), _const_spec((1, D)),
            _const_spec((D, 2 * ff_inner)), _const_spec((1, 2 * ff_inner)),
            _const_spec((ff_inner, D)), _const_spec((1, D)),
        ],
        out_specs=pl.BlockSpec((1, N, D), lambda i: (i, 0, 0)),
        compiler_params=_CPARAMS,
    )(x, gamma.reshape(1, -1), beta.reshape(1, -1),
      p["w1"], p["b1"].reshape(1, -1), p["w2"], p["b2"].reshape(1, -1))


# ---------------------------------------------------------------------------
# BasicTransformerBlock forward (3 fused pallas_calls total)
# ---------------------------------------------------------------------------

def basic_transformer_block(x, context, params, n_heads, d_head):
    x = self_attn_block(x, params["norm1_g"], params["norm1_b"],
                        params["attn1"], n_heads, d_head)
    x = cross_attn_block(x, context, params["norm2_g"], params["norm2_b"],
                         params["attn2"], n_heads, d_head)
    x = ff_block(x, params["norm3_g"], params["norm3_b"], params["ff"])
    return x


# ---------------------------------------------------------------------------
# Pure-JAX reference (for a sanity check)
# ---------------------------------------------------------------------------

def _reference_block(x, context, params, n_heads, d_head):
    hp = jax.lax.Precision.HIGHEST

    def ln(t, g, b):
        m = jnp.mean(t, -1, keepdims=True)
        v = jnp.mean((t - m) ** 2, -1, keepdims=True)
        return (t - m) * jax.lax.rsqrt(v + 1e-5) * g + b

    def attn(xq, ctx, p):
        B, N, _ = xq.shape
        M = ctx.shape[1]
        q = jnp.einsum("bnd,de->bne", xq, p["wq"], precision=hp)
        k = jnp.einsum("bmd,de->bme", ctx, p["wk"], precision=hp)
        v = jnp.einsum("bmd,de->bme", ctx, p["wv"], precision=hp)
        qh = q.reshape(B, N, n_heads, d_head).transpose(0, 2, 1, 3)
        kh = k.reshape(B, M, n_heads, d_head).transpose(0, 2, 1, 3)
        vh = v.reshape(B, M, n_heads, d_head).transpose(0, 2, 1, 3)
        s = jnp.einsum("bhnd,bhmd->bhnm", qh, kh, precision=hp) / math.sqrt(d_head)
        pr = jax.nn.softmax(s, axis=-1)
        o = jnp.einsum("bhnm,bhmd->bhnd", pr, vh, precision=hp)
        o = o.transpose(0, 2, 1, 3).reshape(B, N, n_heads * d_head)
        return jnp.einsum("bne,ed->bnd", o, p["wo"], precision=hp) + p["bo"]

    h = ln(x, params["norm1_g"], params["norm1_b"])
    x = attn(h, h, params["attn1"]) + x
    h = ln(x, params["norm2_g"], params["norm2_b"])
    x = attn(h, context, params["attn2"]) + x
    h = ln(x, params["norm3_g"], params["norm3_b"])
    ffp = params["ff"]
    inner = ffp["w2"].shape[0]
    hf = jnp.einsum("bnd,df->bnf", h, ffp["w1"], precision=hp) + ffp["b1"]
    a, gate = hf[..., :inner], hf[..., inner:]
    g = a * jax.nn.gelu(gate, approximate=False)
    x = jnp.einsum("bnf,fd->bnd", g, ffp["w2"], precision=hp) + ffp["b2"] + x
    return x


# ---------------------------------------------------------------------------
# Deterministic parameter init
# ---------------------------------------------------------------------------

def init_params(key, dim, n_heads, d_head, context_dim, ff_mult=4, dtype=jnp.float32):
    inner = n_heads * d_head
    ff_inner = int(dim * ff_mult)
    keys = jax.random.split(key, 16)
    s = 0.02

    def w(k, shape):
        return (jax.random.normal(k, shape, jnp.float32) * s).astype(dtype)

    return {
        "norm1_g": jnp.ones((dim,), dtype), "norm1_b": jnp.zeros((dim,), dtype),
        "norm2_g": jnp.ones((dim,), dtype), "norm2_b": jnp.zeros((dim,), dtype),
        "norm3_g": jnp.ones((dim,), dtype), "norm3_b": jnp.zeros((dim,), dtype),
        "attn1": {
            "wq": w(keys[0], (dim, inner)),
            "wk": w(keys[1], (dim, inner)),
            "wv": w(keys[2], (dim, inner)),
            "wo": w(keys[3], (inner, dim)),
            "bo": jnp.zeros((dim,), dtype),
        },
        "attn2": {
            "wq": w(keys[4], (dim, inner)),
            "wk": w(keys[5], (context_dim, inner)),
            "wv": w(keys[6], (context_dim, inner)),
            "wo": w(keys[7], (inner, dim)),
            "bo": jnp.zeros((dim,), dtype),
        },
        "ff": {
            "w1": w(keys[8], (dim, 2 * ff_inner)),
            "b1": jnp.zeros((2 * ff_inner,), dtype),
            "w2": w(keys[9], (ff_inner, dim)),
            "b2": jnp.zeros((dim,), dtype),
        },
    }


# ---------------------------------------------------------------------------
# Main
# ---------------------------------------------------------------------------

if __name__ == "__main__":
    # Small shapes consistent with the module
    B, N, M = 2, 8, 8
    dim, n_heads, d_head = 32, 4, 8       # inner_dim = 32
    context_dim = 16

    key = jax.random.PRNGKey(0)
    kx, kc, kp = jax.random.split(key, 3)

    x = jax.random.normal(kx, (B, N, dim), jnp.float32)
    context = jax.random.normal(kc, (B, M, context_dim), jnp.float32)
    params = init_params(kp, dim, n_heads, d_head, context_dim)

    out = basic_transformer_block(x, context, params, n_heads, d_head)
    out = jax.block_until_ready(out)
    assert out.shape == (B, N, dim) and out.dtype == jnp.float32

    ref = jax.block_until_ready(_reference_block(x, context, params, n_heads, d_head))
    max_err = float(jnp.max(jnp.abs(out - ref)))
    assert max_err < 5e-3, f"max abs error vs reference too large: {max_err}"

    print("KERNEL_OK")
</pallas_src>

<mosaic_0001>
module attributes {stable_mosaic.version = 11 : i64} {
  func.func @_self_attn_block_kernel(%arg0: i32, %arg1: memref<1x8x32xf32, #tpu.memory_space<vmem>>, %arg2: memref<1x32xf32, #tpu.memory_space<vmem>>, %arg3: memref<1x32xf32, #tpu.memory_space<vmem>>, %arg4: memref<32x32xf32, #tpu.memory_space<vmem>>, %arg5: memref<32x32xf32, #tpu.memory_space<vmem>>, %arg6: memref<32x32xf32, #tpu.memory_space<vmem>>, %arg7: memref<32x32xf32, #tpu.memory_space<vmem>>, %arg8: memref<1x32xf32, #tpu.memory_space<vmem>>, %arg9: memref<1x8x32xf32, #tpu.memory_space<vmem>>) attributes {dimension_semantics = [#tpu.dimension_semantics<parallel>], iteration_bounds = array<i64: 2>, scalar_prefetch = 0 : i64, scratch_operands = 0 : i64, tpu.core_type = #tpu.core_type<tc>, window_params = [{transform_indices = @transform_0, window_bounds = array<i64: 1, 8, 32>}, {pipeline_mode = #tpu.pipeline_mode<synchronous>, transform_indices = @transform_1, window_bounds = array<i64: 1, 32>}, {pipeline_mode = #tpu.pipeline_mode<synchronous>, transform_indices = @transform_2, window_bounds = array<i64: 1, 32>}, {pipeline_mode = #tpu.pipeline_mode<synchronous>, transform_indices = @transform_3, window_bounds = array<i64: 32, 32>}, {pipeline_mode = #tpu.pipeline_mode<synchronous>, transform_indices = @transform_4, window_bounds = array<i64: 32, 32>}, {pipeline_mode = #tpu.pipeline_mode<synchronous>, transform_indices = @transform_5, window_bounds = array<i64: 32, 32>}, {pipeline_mode = #tpu.pipeline_mode<synchronous>, transform_indices = @transform_6, window_bounds = array<i64: 32, 32>}, {pipeline_mode = #tpu.pipeline_mode<synchronous>, transform_indices = @transform_7, window_bounds = array<i64: 1, 32>}, {transform_indices = @transform_8, window_bounds = array<i64: 1, 8, 32>}]} {
    %c0 = arith.constant 0 : index
    %c0_0 = arith.constant 0 : index
    %c0_1 = arith.constant 0 : index
    %0 = vector.load %arg1[%c0, %c0_0, %c0_1] : memref<1x8x32xf32, #tpu.memory_space<vmem>>, vector<1x8x32xf32>
    %1 = vector.shape_cast %0 : vector<1x8x32xf32> to vector<8x32xf32>
    %c0_2 = arith.constant 0 : index
    %c0_3 = arith.constant 0 : index
    %2 = vector.load %arg2[%c0_2, %c0_3] : memref<1x32xf32, #tpu.memory_space<vmem>>, vector<1x32xf32>
    %c0_4 = arith.constant 0 : index
    %c0_5 = arith.constant 0 : index
    %3 = vector.load %arg3[%c0_4, %c0_5] : memref<1x32xf32, #tpu.memory_space<vmem>>, vector<1x32xf32>
    %cst = arith.constant dense<0.000000e+00> : vector<8xf32>
    %4 = vector.multi_reduction <add>, %1, %cst [1] : vector<8x32xf32> to vector<8xf32>
    %5 = vector.shape_cast %4 : vector<8xf32> to vector<8x1xf32>
    %cst_6 = arith.constant 3.200000e+01 : f32
    %6 = vector.broadcast %cst_6 : f32 to vector<8x1xf32>
    %7 = arith.divf %5, %6 : vector<8x1xf32>
    %8 = vector.broadcast %7 : vector<8x1xf32> to vector<8x32xf32>
    %9 = arith.subf %1, %8 : vector<8x32xf32>
    %10 = arith.mulf %9, %9 : vector<8x32xf32>
    %cst_7 = arith.constant dense<0.000000e+00> : vector<8xf32>
    %11 = vector.multi_reduction <add>, %10, %cst_7 [1] : vector<8x32xf32> to vector<8xf32>
    %12 = vector.shape_cast %11 : vector<8xf32> to vector<8x1xf32>
    %cst_8 = arith.constant 3.200000e+01 : f32
    %13 = vector.broadcast %cst_8 : f32 to vector<8x1xf32>
    %14 = arith.divf %12, %13 : vector<8x1xf32>
    %15 = vector.broadcast %7 : vector<8x1xf32> to vector<8x32xf32>
    %16 = arith.subf %1, %15 : vector<8x32xf32>
    %cst_9 = arith.constant 9.99999974E-6 : f32
    %17 = vector.broadcast %cst_9 : f32 to vector<8x1xf32>
    %18 = arith.addf %14, %17 : vector<8x1xf32>
    %19 = math.rsqrt %18 : vector<8x1xf32>
    %20 = vector.broadcast %19 : vector<8x1xf32> to vector<8x32xf32>
    %21 = arith.mulf %16, %20 : vector<8x32xf32>
    %22 = vector.broadcast %2 : vector<1x32xf32> to vector<8x32xf32>
    %23 = arith.mulf %21, %22 : vector<8x32xf32>
    %24 = vector.broadcast %3 : vector<1x32xf32> to vector<8x32xf32>
    %25 = arith.addf %23, %24 : vector<8x32xf32>
    %c0_10 = arith.constant 0 : index
    %c0_11 = arith.constant 0 : index
    %26 = vector.load %arg4[%c0_10, %c0_11] : memref<32x32xf32, #tpu.memory_space<vmem>>, vector<32x32xf32>
    %c0_12 = arith.constant 0 : index
    %c0_13 = arith.constant 0 : index
    %27 = vector.load %arg5[%c0_12, %c0_13] : memref<32x32xf32, #tpu.memory_space<vmem>>, vector<32x32xf32>
    %c0_14 = arith.constant 0 : index
    %c0_15 = arith.constant 0 : index
    %28 = vector.load %arg6[%c0_14, %c0_15] : memref<32x32xf32, #tpu.memory_space<vmem>>, vector<32x32xf32>
    %c0_16 = arith.constant 0 : index
    %c0_17 = arith.constant 0 : index
    %29 = vector.load %arg7[%c0_16, %c0_17] : memref<32x32xf32, #tpu.memory_space<vmem>>, vector<32x32xf32>
    %c0_18 = arith.constant 0 : index
    %c0_19 = arith.constant 0 : index
    %30 = vector.load %arg8[%c0_18, %c0_19] : memref<1x32xf32, #tpu.memory_space<vmem>>, vector<1x32xf32>
    %cst_20 = arith.constant dense<0.000000e+00> : vector<8x32xf32>
    %31 = tpu.matmul %25, %26, %cst_20 {dimension_numbers = #tpu.dot_dimension_numbers<[1], [0], [0], [1], [0, 0, 1, 1], [], []>} : vector<8x32xf32>, vector<32x32xf32>, vector<8x32xf32> -> vector<8x32xf32>
    %cst_21 = arith.constant 0.353553385 : f32
    %32 = vector.broadcast %cst_21 : f32 to vector<8x32xf32>
    %33 = arith.mulf %31, %32 : vector<8x32xf32>
    %cst_22 = arith.constant dense<0.000000e+00> : vector<8x32xf32>
    %34 = tpu.matmul %25, %27, %cst_22 {dimension_numbers = #tpu.dot_dimension_numbers<[1], [0], [0], [1], [0, 0, 1, 1], [], []>} : vector<8x32xf32>, vector<32x32xf32>, vector<8x32xf32> -> vector<8x32xf32>
    %cst_23 = arith.constant dense<0.000000e+00> : vector<8x32xf32>
    %35 = tpu.matmul %25, %28, %cst_23 {dimension_numbers = #tpu.dot_dimension_numbers<[1], [0], [0], [1], [0, 0, 1, 1], [], []>} : vector<8x32xf32>, vector<32x32xf32>, vector<8x32xf32> -> vector<8x32xf32>
    %36 = vector.extract_strided_slice %33 {offsets = [0, 0], sizes = [8, 8], strides = [1, 1]} : vector<8x32xf32> to vector<8x8xf32>
    %37 = vector.extract_strided_slice %34 {offsets = [0, 0], sizes = [8, 8], strides = [1, 1]} : vector<8x32xf32> to vector<8x8xf32>
    %cst_24 = arith.constant dense<0.000000e+00> : vector<8x8xf32>
    %38 = tpu.matmul %36, %37, %cst_24 {dimension_numbers = #tpu.dot_dimension_numbers<[1], [1], [0], [0], [0, 0, 1, 0], [], []>} : vector<8x8xf32>, vector<8x8xf32>, vector<8x8xf32> -> vector<8x8xf32>
    %cst_25 = arith.constant dense<0xFF800000> : vector<8xf32>
    %39 = vector.multi_reduction <maximumf>, %38, %cst_25 [1] : vector<8x8xf32> to vector<8xf32>
    %40 = vector.shape_cast %39 : vector<8xf32> to vector<8x1xf32>
    %41 = vector.broadcast %40 : vector<8x1xf32> to vector<8x8xf32>
    %42 = arith.subf %38, %41 : vector<8x8xf32>
    %43 = math.exp %42 : vector<8x8xf32>
    %cst_26 = arith.constant dense<0.000000e+00> : vector<8xf32>
    %44 = vector.multi_reduction <add>, %43, %cst_26 [1] : vector<8x8xf32> to vector<8xf32>
    %45 = vector.shape_cast %44 : vector<8xf32> to vector<8x1xf32>
    %46 = tpu.reciprocal %45 {approx = true} : vector<8x1xf32> -> vector<8x1xf32>
    %47 = vector.broadcast %46 : vector<8x1xf32> to vector<8x8xf32>
    %48 = arith.mulf %43, %47 : vector<8x8xf32>
    %49 = vector.extract_strided_slice %35 {offsets = [0, 0], sizes = [8, 8], strides = [1, 1]} : vector<8x32xf32> to vector<8x8xf32>
    %cst_27 = arith.constant dense<0.000000e+00> : vector<8x8xf32>
    %50 = tpu.matmul %48, %49, %cst_27 {dimension_numbers = #tpu.dot_dimension_numbers<[1], [0], [0], [1], [0, 0, 1, 1], [], []>} : vector<8x8xf32>, vector<8x8xf32>, vector<8x8xf32> -> vector<8x8xf32>
    %51 = vector.extract_strided_slice %29 {offsets = [0, 0], sizes = [8, 32], strides = [1, 1]} : vector<32x32xf32> to vector<8x32xf32>
    %cst_28 = arith.constant dense<0.000000e+00> : vector<8x32xf32>
    %52 = tpu.matmul %50, %51, %cst_28 {dimension_numbers = #tpu.dot_dimension_numbers<[1], [0], [0], [1], [0, 0, 1, 1], [], []>} : vector<8x8xf32>, vector<8x32xf32>, vector<8x32xf32> -> vector<8x32xf32>
    %53 = vector.extract_strided_slice %33 {offsets = [0, 8], sizes = [8, 8], strides = [1, 1]} : vector<8x32xf32> to vector<8x8xf32>
    %54 = vector.extract_strided_slice %34 {offsets = [0, 8], sizes = [8, 8], strides = [1, 1]} : vector<8x32xf32> to vector<8x8xf32>
    %cst_29 = arith.constant dense<0.000000e+00> : vector<8x8xf32>
    %55 = tpu.matmul %53, %54, %cst_29 {dimension_numbers = #tpu.dot_dimension_numbers<[1], [1], [0], [0], [0, 0, 1, 0], [], []>} : vector<8x8xf32>, vector<8x8xf32>, vector<8x8xf32> -> vector<8x8xf32>
    %cst_30 = arith.constant dense<0xFF800000> : vector<8xf32>
    %56 = vector.multi_reduction <maximumf>, %55, %cst_30 [1] : vector<8x8xf32> to vector<8xf32>
    %57 = vector.shape_cast %56 : vector<8xf32> to vector<8x1xf32>
    %58 = vector.broadcast %57 : vector<8x1xf32> to vector<8x8xf32>
    %59 = arith.subf %55, %58 : vector<8x8xf32>
    %60 = math.exp %59 : vector<8x8xf32>
    %cst_31 = arith.constant dense<0.000000e+00> : vector<8xf32>
    %61 = vector.multi_reduction <add>, %60, %cst_31 [1] : vector<8x8xf32> to vector<8xf32>
    %62 = vector.shape_cast %61 : vector<8xf32> to vector<8x1xf32>
    %63 = tpu.reciprocal %62 {approx = true} : vector<8x1xf32> -> vector<8x1xf32>
    %64 = vector.broadcast %63 : vector<8x1xf32> to vector<8x8xf32>
    %65 = arith.mulf %60, %64 : vector<8x8xf32>
    %66 = vector.extract_strided_slice %35 {offsets = [0, 8], sizes = [8, 8], strides = [1, 1]} : vector<8x32xf32> to vector<8x8xf32>
    %cst_32 = arith.constant dense<0.000000e+00> : vector<8x8xf32>
    %67 = tpu.matmul %65, %66, %cst_32 {dimension_numbers = #tpu.dot_dimension_numbers<[1], [0], [0], [1], [0, 0, 1, 1], [], []>} : vector<8x8xf32>, vector<8x8xf32>, vector<8x8xf32> -> vector<8x8xf32>
    %68 = vector.extract_strided_slice %29 {offsets = [8, 0], sizes = [8, 32], strides = [1, 1]} : vector<32x32xf32> to vector<8x32xf32>
    %cst_33 = arith.constant dense<0.000000e+00> : vector<8x32xf32>
    %69 = tpu.matmul %67, %68, %cst_33 {dimension_numbers = #tpu.dot_dimension_numbers<[1], [0], [0], [1], [0, 0, 1, 1], [], []>} : vector<8x8xf32>, vector<8x32xf32>, vector<8x32xf32> -> vector<8x32xf32>
    %70 = arith.addf %52, %69 : vector<8x32xf32>
    %71 = vector.extract_strided_slice %33 {offsets = [0, 16], sizes = [8, 8], strides = [1, 1]} : vector<8x32xf32> to vector<8x8xf32>
    %72 = vector.extract_strided_slice %34 {offsets = [0, 16], sizes = [8, 8], strides = [1, 1]} : vector<8x32xf32> to vector<8x8xf32>
    %cst_34 = arith.constant dense<0.000000e+00> : vector<8x8xf32>
    %73 = tpu.matmul %71, %72, %cst_34 {dimension_numbers = #tpu.dot_dimension_numbers<[1], [1], [0], [0], [0, 0, 1, 0], [], []>} : vector<8x8xf32>, vector<8x8xf32>, vector<8x8xf32> -> vector<8x8xf32>
    %cst_35 = arith.constant dense<0xFF800000> : vector<8xf32>
    %74 = vector.multi_reduction <maximumf>, %73, %cst_35 [1] : vector<8x8xf32> to vector<8xf32>
    %75 = vector.shape_cast %74 : vector<8xf32> to vector<8x1xf32>
    %76 = vector.broadcast %75 : vector<8x1xf32> to vector<8x8xf32>
    %77 = arith.subf %73, %76 : vector<8x8xf32>
    %78 = math.exp %77 : vector<8x8xf32>
    %cst_36 = arith.constant dense<0.000000e+00> : vector<8xf32>
    %79 = vector.multi_reduction <add>, %78, %cst_36 [1] : vector<8x8xf32> to vector<8xf32>
    %80 = vector.shape_cast %79 : vector<8xf32> to vector<8x1xf32>
    %81 = tpu.reciprocal %80 {approx = true} : vector<8x1xf32> -> vector<8x1xf32>
    %82 = vector.broadcast %81 : vector<8x1xf32> to vector<8x8xf32>
    %83 = arith.mulf %78, %82 : vector<8x8xf32>
    %84 = vector.extract_strided_slice %35 {offsets = [0, 16], sizes = [8, 8], strides = [1, 1]} : vector<8x32xf32> to vector<8x8xf32>
    %cst_37 = arith.constant dense<0.000000e+00> : vector<8x8xf32>
    %85 = tpu.matmul %83, %84, %cst_37 {dimension_numbers = #tpu.dot_dimension_numbers<[1], [0], [0], [1], [0, 0, 1, 1], [], []>} : vector<8x8xf32>, vector<8x8xf32>, vector<8x8xf32> -> vector<8x8xf32>
    %86 = vector.extract_strided_slice %29 {offsets = [16, 0], sizes = [8, 32], strides = [1, 1]} : vector<32x32xf32> to vector<8x32xf32>
    %cst_38 = arith.constant dense<0.000000e+00> : vector<8x32xf32>
    %87 = tpu.matmul %85, %86, %cst_38 {dimension_numbers = #tpu.dot_dimension_numbers<[1], [0], [0], [1], [0, 0, 1, 1], [], []>} : vector<8x8xf32>, vector<8x32xf32>, vector<8x32xf32> -> vector<8x32xf32>
    %88 = arith.addf %70, %87 : vector<8x32xf32>
    %89 = vector.extract_strided_slice %33 {offsets = [0, 24], sizes = [8, 8], strides = [1, 1]} : vector<8x32xf32> to vector<8x8xf32>
    %90 = vector.extract_strided_slice %34 {offsets = [0, 24], sizes = [8, 8], strides = [1, 1]} : vector<8x32xf32> to vector<8x8xf32>
    %cst_39 = arith.constant dense<0.000000e+00> : vector<8x8xf32>
    %91 = tpu.matmul %89, %90, %cst_39 {dimension_numbers = #tpu.dot_dimension_numbers<[1], [1], [0], [0], [0, 0, 1, 0], [], []>} : vector<8x8xf32>, vector<8x8xf32>, vector<8x8xf32> -> vector<8x8xf32>
    %cst_40 = arith.constant dense<0xFF800000> : vector<8xf32>
    %92 = vector.multi_reduction <maximumf>, %91, %cst_40 [1] : vector<8x8xf32> to vector<8xf32>
    %93 = vector.shape_cast %92 : vector<8xf32> to vector<8x1xf32>
    %94 = vector.broadcast %93 : vector<8x1xf32> to vector<8x8xf32>
    %95 = arith.subf %91, %94 : vector<8x8xf32>
    %96 = math.exp %95 : vector<8x8xf32>
    %cst_41 = arith.constant dense<0.000000e+00> : vector<8xf32>
    %97 = vector.multi_reduction <add>, %96, %cst_41 [1] : vector<8x8xf32> to vector<8xf32>
    %98 = vector.shape_cast %97 : vector<8xf32> to vector<8x1xf32>
    %99 = tpu.reciprocal %98 {approx = true} : vector<8x1xf32> -> vector<8x1xf32>
    %100 = vector.broadcast %99 : vector<8x1xf32> to vector<8x8xf32>
    %101 = arith.mulf %96, %100 : vector<8x8xf32>
    %102 = vector.extract_strided_slice %35 {offsets = [0, 24], sizes = [8, 8], strides = [1, 1]} : vector<8x32xf32> to vector<8x8xf32>
    %cst_42 = arith.constant dense<0.000000e+00> : vector<8x8xf32>
    %103 = tpu.matmul %101, %102, %cst_42 {dimension_numbers = #tpu.dot_dimension_numbers<[1], [0], [0], [1], [0, 0, 1, 1], [], []>} : vector<8x8xf32>, vector<8x8xf32>, vector<8x8xf32> -> vector<8x8xf32>
    %104 = vector.extract_strided_slice %29 {offsets = [24, 0], sizes = [8, 32], strides = [1, 1]} : vector<32x32xf32> to vector<8x32xf32>
    %cst_43 = arith.constant dense<0.000000e+00> : vector<8x32xf32>
    %105 = tpu.matmul %103, %104, %cst_43 {dimension_numbers = #tpu.dot_dimension_numbers<[1], [0], [0], [1], [0, 0, 1, 1], [], []>} : vector<8x8xf32>, vector<8x32xf32>, vector<8x32xf32> -> vector<8x32xf32>
    %106 = arith.addf %88, %105 : vector<8x32xf32>
    %107 = vector.broadcast %30 : vector<1x32xf32> to vector<8x32xf32>
    %108 = arith.addf %106, %107 : vector<8x32xf32>
    %109 = arith.addf %108, %1 : vector<8x32xf32>
    %c0_44 = arith.constant 0 : index
    %c0_45 = arith.constant 0 : index
    %c0_46 = arith.constant 0 : index
    %110 = vector.load %arg9[%c0_44, %c0_45, %c0_46] : memref<1x8x32xf32, #tpu.memory_space<vmem>>, vector<1x8x32xf32>
    %111 = vector.shape_cast %110 : vector<1x8x32xf32> to vector<8x32xf32>
    %112 = vector.shape_cast %109 : vector<8x32xf32> to vector<1x8x32xf32>
    tpu.vector_store %arg9[%c0_44, %c0_45, %c0_46], %112 {strides = array<i32>} : memref<1x8x32xf32, #tpu.memory_space<vmem>>, vector<1x8x32xf32>,
    return
  }
  func.func @transform_0(%arg0: i32) -> (i32, i32, i32) {
    %c0_i32 = arith.constant 0 : i32
    %c0_i32_0 = arith.constant 0 : i32
    %c0_i32_1 = arith.constant 0 : i32
    return %arg0, %c0_i32, %c0_i32_0 : i32, i32, i32
  }
  func.func @transform_1(%arg0: i32) -> (i32, i32) {
    %c0_i32 = arith.constant 0 : i32
    %c0_i32_0 = arith.constant 0 : i32
    %c0_i32_1 = arith.constant 0 : i32
    return %c0_i32, %c0_i32_0 : i32, i32
  }
  func.func @transform_2(%arg0: i32) -> (i32, i32) {
    %c0_i32 = arith.constant 0 : i32
    %c0_i32_0 = arith.constant 0 : i32
    %c0_i32_1 = arith.constant 0 : i32
    return %c0_i32, %c0_i32_0 : i32, i32
  }
  func.func @transform_3(%arg0: i32) -> (i32, i32) {
    %c0_i32 = arith.constant 0 : i32
    %c0_i32_0 = arith.constant 0 : i32
    %c0_i32_1 = arith.constant 0 : i32
    return %c0_i32, %c0_i32_0 : i32, i32
  }
  func.func @transform_4(%arg0: i32) -> (i32, i32) {
    %c0_i32 = arith.constant 0 : i32
    %c0_i32_0 = arith.constant 0 : i32
    %c0_i32_1 = arith.constant 0 : i32
    return %c0_i32, %c0_i32_0 : i32, i32
  }
  func.func @transform_5(%arg0: i32) -> (i32, i32) {
    %c0_i32 = arith.constant 0 : i32
    %c0_i32_0 = arith.constant 0 : i32
    %c0_i32_1 = arith.constant 0 : i32
    return %c0_i32, %c0_i32_0 : i32, i32
  }
  func.func @transform_6(%arg0: i32) -> (i32, i32) {
    %c0_i32 = arith.constant 0 : i32
    %c0_i32_0 = arith.constant 0 : i32
    %c0_i32_1 = arith.constant 0 : i32
    return %c0_i32, %c0_i32_0 : i32, i32
  }
  func.func @transform_7(%arg0: i32) -> (i32, i32) {
    %c0_i32 = arith.constant 0 : i32
    %c0_i32_0 = arith.constant 0 : i32
    %c0_i32_1 = arith.constant 0 : i32
    return %c0_i32, %c0_i32_0 : i32, i32
  }
  func.func @transform_8(%arg0: i32) -> (i32, i32, i32) {
    %c0_i32 = arith.constant 0 : i32
    %c0_i32_0 = arith.constant 0 : i32
    %c0_i32_1 = arith.constant 0 : i32
    return %arg0, %c0_i32, %c0_i32_0 : i32, i32, i32
  }
}

</mosaic_0001>

<llo_original>
// kernel: tpu_custom_call.1
$region0: #{tpu_custom_call.1}
  #allocation0 [shape = 'u32[]', space=smem, size = 0x4, offset = 0x4, fixed_abs, tag = 'smem constant byte address 0x4 - core index']
  #allocation1 [shape = 'u32[144,128]{1,0:T(1,128)}', space=vmem, size = 0x12000, scoped, tag = 'internal scratch']
  %s0 = inlined_call_operand.hbm [shape: f32[2,8,32], index: 0, kind: input, shape index: {}]
  %s1 = inlined_call_operand.vmem [shape: f32[1,32], index: 1, kind: input, shape index: {}]
  %s2 = inlined_call_operand.vmem [shape: f32[1,32], index: 2, kind: input, shape index: {}]
  %s3 = inlined_call_operand.hbm [shape: f32[32,32], index: 3, kind: input, shape index: {}]
  %s4 = inlined_call_operand.hbm [shape: f32[32,32], index: 4, kind: input, shape index: {}]
  %s5 = inlined_call_operand.hbm [shape: f32[32,32], index: 5, kind: input, shape index: {}]
  %s6 = inlined_call_operand.hbm [shape: f32[32,32], index: 6, kind: input, shape index: {}]
  %s7 = inlined_call_operand.vmem [shape: f32[1,32], index: 7, kind: input, shape index: {}]
  %s8 = inlined_call_operand.hbm [shape: f32[2,8,32], index: 8, kind: output, shape index: {}]
  %s9 = sld [smem:[#allocation0]]
  $region85: #{tpu_custom_call.1} parent=0
    _
  %s11 = ssub.s32 1, %s9
  %s12 = scalar_select 0, %s11, %s9
  $region1: #{tpu_custom_call.1} parent=0
    #allocation2 [shape = 'u8[8192]{0}', space=vmem, size = 0x2000, scoped, tag = 'input window, operand 0']
    #allocation3 [shape = 's32[2]{0}', space=sflag, size = 0x8, scoped, tag = 'scoped memory for tpu_custom_call.1']
    #allocation4 [shape = 's32[2]{0}', space=sflag, size = 0x8, scoped, tag = 'scoped memory for tpu_custom_call.1']
    #allocation5 [shape = 'u8[16384]{0}', space=vmem, size = 0x4000, scoped, tag = 'input window, operand 3, single buffered']
    #allocation6 [shape = 's32[1]{0}', space=sflag, size = 0x4, scoped, tag = 'scoped memory for tpu_custom_call.1']
    #allocation7 [shape = 'u8[16384]{0}', space=vmem, size = 0x4000, scoped, tag = 'input window, operand 4, single buffered']
    #allocation8 [shape = 'u8[16384]{0}', space=vmem, size = 0x4000, scoped, tag = 'input window, operand 5, single buffered']
    #allocation9 [shape = 's32[1]{0}', space=sflag, size = 0x4, scoped, tag = 'scoped memory for tpu_custom_call.1']
    #allocation10 [shape = 'u8[16384]{0}', space=vmem, size = 0x4000, scoped, tag = 'input window, operand 6, single buffered']
    #allocation11 [shape = 'u8[8192]{0}', space=vmem, size = 0x2000, scoped, tag = 'output window, operand 0']
    %13 = vsyncpa [#allocation3], 0
    %s14 = scalar_lea.sflag [#allocation3], 1
    %15 = vsyncpa %s14, 0
    %16 = vsyncpa [#allocation6], 0
    %17 = vsyncpa [#allocation9], 0
    %18 = vsyncpa [#allocation4], 0
    %s19 = scalar_lea.sflag [#allocation4], 1
    %20 = vsyncpa %s19, 0
    loop: start=0, step=1, limit=4
    $region2: #{tpu_custom_call.1} parent=1 // loop_pre_header
      _
    $region3: #{tpu_custom_call.1} parent=1 // loop_header
      %s22 = sphi 0, %s26
      %p23 = scmp.ge.s32.totalorder %s22, 4
      %s32 = sphi 0, %s34
      %s35 = sphi 0, %s32
      %s36 = sphi 0, %s35
      %s52 = sphi 0, %s36
      %s56 = sphi 0, %s56
      %s58 = sphi 0, %s56
      %s59 = sphi 0, %s58
      %s73 = sphi 0, %s59
      %s77 = sphi 0, %s77
      %s79 = sphi 0, %s77
      %s80 = sphi 0, %s79
      %s94 = sphi 0, %s80
      %s98 = sphi 0, %s98
      %s100 = sphi 0, %s98
      %s101 = sphi 0, %s100
      %s115 = sphi 0, %s101
      %s119 = sphi 0, %s119
      %s121 = sphi 0, %s119
      %s122 = sphi 0, %s121
      %s136 = sphi 0, %s122
      %s140 = sphi 0, %s140
      %s142 = sphi 0, %s140
      %s143 = sphi 0, %s142
      %s157 = sphi 0, %s143
      %s161 = sphi 0, %s161
      %s163 = sphi 0, %s161
      %s164 = sphi 0, %s163
      %s178 = sphi 0, %s164
      %s182 = sphi 0, %s182
      %s184 = sphi 0, %s182
      %s185 = sphi 0, %s184
      %s199 = sphi 0, %s185
      %s205 = sphi 0, %s207
      %s208 = sphi 0, %s205
      %s209 = sphi 0, %s208
      %s225 = sphi 0, %s209
    $region4: #{tpu_custom_call.1} parent=1 // loop_header_branch
      %25 = sbr.rel (%p23) target = $region8
    $region5: #{tpu_custom_call.1} parent=1 // loop_body
      %s27 = ssub.s32 %s22, 1
      %s28 = ssub.s32 %s22, 2
      %s29 = sadd.s32 %s22, 1
      %s30 = ssub.s32 %s22, %s29
      %p31 = scmp.eq.s32.totalorder %s30, 0
      %s33 = sadd.s32 %s32, 1
      %s34 = scalar_select %p31, %s32, %s33
      %p37 = pneg %p31
      %p38 = scmp.eq.s32.totalorder %s22, 1
      %p39 = por %p37, %p38
      %p40 = scmp.ne.s32.totalorder %s32, %s35
      %p41 = scmp.eq.s32.totalorder %s22, 0
      %p42 = por %p40, %p41
      %p43 = scmp.ne.s32.totalorder %s32, %s35
      %p44 = scmp.eq.s32.totalorder %s27, 1
      %p45 = por %p43, %p44
      %p46 = scmp.ne.s32.totalorder %s35, %s36
      %p47 = scmp.eq.s32.totalorder %s27, 0
      %p48 = por %p46, %p47
      %p49 = scmp.ne.s32.totalorder %s35, %s36
      %p50 = scmp.eq.s32.totalorder %s28, 1
      %p51 = por %p49, %p50
      %p53 = scmp.ne.s32.totalorder %s36, %s52
      %p54 = scmp.eq.s32.totalorder %s28, 0
      %p55 = por %p53, %p54
      %s57 = sadd.s32 %s56, 1
      %p60 = scmp.eq.s32.totalorder %s22, 1
      %p61 = scmp.ne.s32.totalorder %s56, %s58
      %p62 = scmp.eq.s32.totalorder %s22, 0
      %p63 = por %p61, %p62
      %p64 = scmp.ne.s32.totalorder %s56, %s58
      %p65 = scmp.eq.s32.totalorder %s27, 1
      %p66 = por %p64, %p65
      %p67 = scmp.ne.s32.totalorder %s58, %s59
      %p68 = scmp.eq.s32.totalorder %s27, 0
      %p69 = por %p67, %p68
      %p70 = scmp.ne.s32.totalorder %s58, %s59
      %p71 = scmp.eq.s32.totalorder %s28, 1
      %p72 = por %p70, %p71
      %p74 = scmp.ne.s32.totalorder %s59, %s73
      %p75 = scmp.eq.s32.totalorder %s28, 0
      %p76 = por %p74, %p75
      %s78 = sadd.s32 %s77, 1
      %p81 = scmp.eq.s32.totalorder %s22, 1
      %p82 = scmp.ne.s32.totalorder %s77, %s79
      %p83 = scmp.eq.s32.totalorder %s22, 0
      %p84 = por %p82, %p83
      %p85 = scmp.ne.s32.totalorder %s77, %s79
      %p86 = scmp.eq.s32.totalorder %s27, 1
      %p87 = por %p85, %p86
      %p88 = scmp.ne.s32.totalorder %s79, %s80
      %p89 = scmp.eq.s32.totalorder %s27, 0
      %p90 = por %p88, %p89
      %p91 = scmp.ne.s32.totalorder %s79, %s80
      %p92 = scmp.eq.s32.totalorder %s28, 1
      %p93 = por %p91, %p92
      %p95 = scmp.ne.s32.totalorder %s80, %s94
      %p96 = scmp.eq.s32.totalorder %s28, 0
      %p97 = por %p95, %p96
      %s99 = sadd.s32 %s98, 1
      %p102 = scmp.eq.s32.totalorder %s22, 1
      %p103 = scmp.ne.s32.totalorder %s98, %s100
      %p104 = scmp.eq.s32.totalorder %s22, 0
      %p105 = por %p103, %p104
      %p106 = scmp.ne.s32.totalorder %s98, %s100
      %p107 = scmp.eq.s32.totalorder %s27, 1
      %p108 = por %p106, %p107
      %p109 = scmp.ne.s32.totalorder %s100, %s101
      %p110 = scmp.eq.s32.totalorder %s27, 0
      %p111 = por %p109, %p110
      %p112 = scmp.ne.s32.totalorder %s100, %s101
      %p113 = scmp.eq.s32.totalorder %s28, 1
      %p114 = por %p112, %p113
      %p116 = scmp.ne.s32.totalorder %s101, %s115
      %p117 = scmp.eq.s32.totalorder %s28, 0
      %p118 = por %p116, %p117
      %s120 = sadd.s32 %s119, 1
      %p123 = scmp.eq.s32.totalorder %s22, 1
      %p124 = scmp.ne.s32.totalorder %s119, %s121
      %p125 = scmp.eq.s32.totalorder %s22, 0
      %p126 = por %p124, %p125
      %p127 = scmp.ne.s32.totalorder %s119, %s121
      %p128 = scmp.eq.s32.totalorder %s27, 1
      %p129 = por %p127, %p128
      %p130 = scmp.ne.s32.totalorder %s121, %s122
      %p131 = scmp.eq.s32.totalorder %s27, 0
      %p132 = por %p130, %p131
      %p133 = scmp.ne.s32.totalorder %s121, %s122
      %p134 = scmp.eq.s32.totalorder %s28, 1
      %p135 = por %p133, %p134
      %p137 = scmp.ne.s32.totalorder %s122, %s136
      %p138 = scmp.eq.s32.totalorder %s28, 0
      %p139 = por %p137, %p138
      %s141 = sadd.s32 %s140, 1
      %p144 = scmp.eq.s32.totalorder %s22, 1
      %p145 = scmp.ne.s32.totalorder %s140, %s142
      %p146 = scmp.eq.s32.totalorder %s22, 0
      %p147 = por %p145, %p146
      %p148 = scmp.ne.s32.totalorder %s140, %s142
      %p149 = scmp.eq.s32.totalorder %s27, 1
      %p150 = por %p148, %p149
      %p151 = scmp.ne.s32.totalorder %s142, %s143
      %p152 = scmp.eq.s32.totalorder %s27, 0
      %p153 = por %p151, %p152
      %p154 = scmp.ne.s32.totalorder %s142, %s143
      %p155 = scmp.eq.s32.totalorder %s28, 1
      %p156 = por %p154, %p155
      %p158 = scmp.ne.s32.totalorder %s143, %s157
      %p159 = scmp.eq.s32.totalorder %s28, 0
      %p160 = por %p158, %p159
      %s162 = sadd.s32 %s161, 1
      %p165 = scmp.eq.s32.totalorder %s22, 1
      %p166 = scmp.ne.s32.totalorder %s161, %s163
      %p167 = scmp.eq.s32.totalorder %s22, 0
      %p168 = por %p166, %p167
      %p169 = scmp.ne.s32.totalorder %s161, %s163
      %p170 = scmp.eq.s32.totalorder %s27, 1
      %p171 = por %p169, %p170
      %p172 = scmp.ne.s32.totalorder %s163, %s164
      %p173 = scmp.eq.s32.totalorder %s27, 0
      %p174 = por %p172, %p173
      %p175 = scmp.ne.s32.totalorder %s163, %s164
      %p176 = scmp.eq.s32.totalorder %s28, 1
      %p177 = por %p175, %p176
      %p179 = scmp.ne.s32.totalorder %s164, %s178
      %p180 = scmp.eq.s32.totalorder %s28, 0
      %p181 = por %p179, %p180
      %s183 = sadd.s32 %s182, 1
      %p186 = scmp.eq.s32.totalorder %s22, 1
      %p187 = scmp.ne.s32.totalorder %s182, %s184
      %p188 = scmp.eq.s32.totalorder %s22, 0
      %p189 = por %p187, %p188
      %p190 = scmp.ne.s32.totalorder %s182, %s184
      %p191 = scmp.eq.s32.totalorder %s27, 1
      %p192 = por %p190, %p191
      %p193 = scmp.ne.s32.totalorder %s184, %s185
      %p194 = scmp.eq.s32.totalorder %s27, 0
      %p195 = por %p193, %p194
      %p196 = scmp.ne.s32.totalorder %s184, %s185
      %p197 = scmp.eq.s32.totalorder %s28, 1
      %p198 = por %p196, %p197
      %p200 = scmp.ne.s32.totalorder %s185, %s199
      %p201 = scmp.eq.s32.totalorder %s28, 0
      %p202 = por %p200, %p201
      %s203 = ssub.s32 %s22, %s29
      %p204 = scmp.eq.s32.totalorder %s203, 0
      %s206 = sadd.s32 %s205, 1
      %s207 = scalar_select %p204, %s205, %s206
      %p210 = pneg %p204
      %p211 = scmp.eq.s32.totalorder %s22, 1
      %p212 = por %p210, %p211
      %p213 = scmp.ne.s32.totalorder %s205, %s208
      %p214 = scmp.eq.s32.totalorder %s22, 0
      %p215 = por %p213, %p214
      %p216 = scmp.ne.s32.totalorder %s205, %s208
      %p217 = scmp.eq.s32.totalorder %s27, 1
      %p218 = por %p216, %p217
      %p219 = scmp.ne.s32.totalorder %s208, %s209
      %p220 = scmp.eq.s32.totalorder %s27, 0
      %p221 = por %p219, %p220
      %p222 = scmp.ne.s32.totalorder %s208, %s209
      %p223 = scmp.eq.s32.totalorder %s28, 1
      %p224 = por %p222, %p223
      %p226 = scmp.ne.s32.totalorder %s209, %s225
      %p227 = scmp.eq.s32.totalorder %s28, 0
      %p228 = por %p226, %p227
      %p229 = scmp.le.s32.totalorder 1, %s22
      %p230 = scmp.lt.s32.totalorder %s22, 3
      %p231 = pnand %p229, %p230
      %p232 = pneg %p231
      // Predicated region
      $region9: #{tpu_custom_call.1} parent=5 // pred_check
        _
      $region10: #{tpu_custom_call.1} parent=5 // pred_check_branch
        %234 = sbr.rel (%p231) target = $region12
      $region11: #{tpu_custom_call.1} parent=5 // pred_region
        %s235 = ssub.s32 %s22, 1
        // Predicated region
        $region13: #{tpu_custom_call.1} parent=11 // pred_check
          %p236 = pneg %p69
        $region14: #{tpu_custom_call.1} parent=11 // pred_check_branch
          %238 = sbr.rel (%p236) target = $region16
        $region15: #{tpu_custom_call.1} parent=11 // pred_region
          _
        $region16: #{tpu_custom_call.1} parent=11 // pred_fallthru
          _
        // Predicated region
        $region17: #{tpu_custom_call.1} parent=11 // pred_check
          %p239 = pneg %p90
        $region18: #{tpu_custom_call.1} parent=11 // pred_check_branch
          %241 = sbr.rel (%p239) target = $region20
        $region19: #{tpu_custom_call.1} parent=11 // pred_region
          _
        $region20: #{tpu_custom_call.1} parent=11 // pred_fallthru
          _
        // Predicated region
        $region21: #{tpu_custom_call.1} parent=11 // pred_check
          %p242 = pneg %p111
        $region22: #{tpu_custom_call.1} parent=11 // pred_check_branch
          %244 = sbr.rel (%p242) target = $region24
        $region23: #{tpu_custom_call.1} parent=11 // pred_region
          %s246 = ssub.s32 512, 512
          %247 = vsyncadd [#allocation6], %s246
          %s248 = sshll.u32 [#allocation5], 4
          %s249 = int_to_ptr.vmem [resolvable:$true] %s248
          %254 = dma.hbm_to_vmem [thread:$0]  %s3, 512, %s249, [#allocation6], 128, 128, 8
        $region24: #{tpu_custom_call.1} parent=11 // pred_fallthru
          _
        // Predicated region
        $region25: #{tpu_custom_call.1} parent=11 // pred_check
          %p255 = pneg %p132
        $region26: #{tpu_custom_call.1} parent=11 // pred_check_branch
          %257 = sbr.rel (%p255) target = $region28
        $region27: #{tpu_custom_call.1} parent=11 // pred_region
          %s259 = ssub.s32 512, 512
          %260 = vsyncadd [#allocation6], %s259
          %s261 = sshll.u32 [#allocation7], 4
          %s262 = int_to_ptr.vmem [resolvable:$true] %s261
          %267 = dma.hbm_to_vmem [thread:$0]  %s4, 512, %s262, [#allocation6], 128, 128, 8
        $region28: #{tpu_custom_call.1} parent=11 // pred_fallthru
          _
        // Predicated region
        $region29: #{tpu_custom_call.1} parent=11 // pred_check
          %p268 = pneg %p153
        $region30: #{tpu_custom_call.1} parent=11 // pred_check_branch
          %270 = sbr.rel (%p268) target = $region32
        $region31: #{tpu_custom_call.1} parent=11 // pred_region
          %s272 = ssub.s32 512, 512
          %273 = vsyncadd [#allocation9], %s272
          %s274 = sshll.u32 [#allocation8], 4
          %s275 = int_to_ptr.vmem [resolvable:$true] %s274
          %280 = dma.hbm_to_vmem [thread:$0]  %s5, 512, %s275, [#allocation9], 128, 128, 8
        $region32: #{tpu_custom_call.1} parent=11 // pred_fallthru
          _
        // Predicated region
        $region33: #{tpu_custom_call.1} parent=11 // pred_check
          %p281 = pneg %p174
        $region34: #{tpu_custom_call.1} parent=11 // pred_check_branch
          %283 = sbr.rel (%p281) target = $region36
        $region35: #{tpu_custom_call.1} parent=11 // pred_region
          %s285 = ssub.s32 512, 512
          %286 = vsyncadd [#allocation9], %s285
          %s287 = sshll.u32 [#allocation10], 4
          %s288 = int_to_ptr.vmem [resolvable:$true] %s287
          %293 = dma.hbm_to_vmem [thread:$0]  %s6, 512, %s288, [#allocation9], 128, 128, 8
        $region36: #{tpu_custom_call.1} parent=11 // pred_fallthru
          _
        // Predicated region
        $region37: #{tpu_custom_call.1} parent=11 // pred_check
          %p294 = pneg %p195
        $region38: #{tpu_custom_call.1} parent=11 // pred_check_branch
          %296 = sbr.rel (%p294) target = $region40
        $region39: #{tpu_custom_call.1} parent=11 // pred_region
          _
        $region40: #{tpu_custom_call.1} parent=11 // pred_fallthru
          _
      $region12: #{tpu_custom_call.1} parent=5 // pred_fallthru
        _
      %p297 = scmp.lt.s32.totalorder %s22, 2
      // Predicated region
      $region41: #{tpu_custom_call.1} parent=5 // pred_check
        %p298 = pneg %p297
      $region42: #{tpu_custom_call.1} parent=5 // pred_check_branch
        %300 = sbr.rel (%p298) target = $region44
      $region43: #{tpu_custom_call.1} parent=5 // pred_region
        // Predicated region
        $region45: #{tpu_custom_call.1} parent=43 // pred_check
          %p301 = pneg %p42
        $region46: #{tpu_custom_call.1} parent=43 // pred_check_branch
          %303 = sbr.rel (%p301) target = $region48
        $region47: #{tpu_custom_call.1} parent=43 // pred_region
          %s304 = sand.u32 %s32, 1
          %s305 = scalar_lea.sflag [#allocation3], %s304
          %s306 = sand.u32 %s32, 1
          %s307 = smul.addr %s306, 8
          %s308 = scalar_lea.vmem [#allocation2], %s307
          %s310 = ssub.s32 128, 128
          %311 = vsyncadd %s305, %s310
          %s312 = smul.addr %s22, 128
          %s313 = scalar_lea.hbm %s0, %s312
          %s315 = sshll.u32 %s308, 4
          %s316 = int_to_ptr.vmem [resolvable:$true] %s315
          %318 = dma.hbm_to_vmem [thread:$0]  %s313, 128, %s316, %s305
        $region48: #{tpu_custom_call.1} parent=43 // pred_fallthru
          _
      $region44: #{tpu_custom_call.1} parent=5 // pred_fallthru
        _
      %p319 = scmp.le.s32.totalorder 1, %s22
      %p320 = scmp.lt.s32.totalorder %s22, 3
      %p321 = pnand %p319, %p320
      %p322 = pneg %p321
      // Predicated region
      $region49: #{tpu_custom_call.1} parent=5 // pred_check
        _
      $region50: #{tpu_custom_call.1} parent=5 // pred_check_branch
        %324 = sbr.rel (%p321) target = $region52
      $region51: #{tpu_custom_call.1} parent=5 // pred_region
        %s325 = ssub.s32 %s22, 1
        %s326 = sand.u32 %s35, 1
        %s327 = scalar_lea.sflag [#allocation3], %s326
        %s328 = sand.u32 %s35, 1
        %s329 = smul.addr %s328, 8
        %s330 = scalar_lea.vmem [#allocation2], %s329
        // Predicated region
        $region53: #{tpu_custom_call.1} parent=51 // pred_check
          %p331 = pneg %p48
        $region54: #{tpu_custom_call.1} parent=51 // pred_check_branch
          %333 = sbr.rel (%p331) target = $region56
        $region55: #{tpu_custom_call.1} parent=51 // pred_region
          %334 = dma.done %s327, 128
        $region56: #{tpu_custom_call.1} parent=51 // pred_fallthru
          _
        // Predicated region
        $region57: #{tpu_custom_call.1} parent=51 // pred_check
          %p335 = pneg %p111
        $region58: #{tpu_custom_call.1} parent=51 // pred_check_branch
          %337 = sbr.rel (%p335) target = $region60
        $region59: #{tpu_custom_call.1} parent=51 // pred_region
          %338 = dma.done [#allocation6], 512
        $region60: #{tpu_custom_call.1} parent=51 // pred_fallthru
          _
        // Predicated region
        $region61: #{tpu_custom_call.1} parent=51 // pred_check
          %p339 = pneg %p132
        $region62: #{tpu_custom_call.1} parent=51 // pred_check_branch
          %341 = sbr.rel (%p339) target = $region64
        $region63: #{tpu_custom_call.1} parent=51 // pred_region
          %342 = dma.done [#allocation6], 512
        $region64: #{tpu_custom_call.1} parent=51 // pred_fallthru
          _
        // Predicated region
        $region65: #{tpu_custom_call.1} parent=51 // pred_check
          %p343 = pneg %p153
        $region66: #{tpu_custom_call.1} parent=51 // pred_check_branch
          %345 = sbr.rel (%p343) target = $region68
        $region67: #{tpu_custom_call.1} parent=51 // pred_region
          %346 = dma.done [#allocation9], 512
        $region68: #{tpu_custom_call.1} parent=51 // pred_fallthru
          _
        // Predicated region
        $region69: #{tpu_custom_call.1} parent=51 // pred_check
          %p347 = pneg %p174
        $region70: #{tpu_custom_call.1} parent=51 // pred_check_branch
          %349 = sbr.rel (%p347) target = $region72
        $region71: #{tpu_custom_call.1} parent=51 // pred_region
          %350 = dma.done [#allocation9], 512
        $region72: #{tpu_custom_call.1} parent=51 // pred_fallthru
          _
        %s351 = sand.u32 %s35, 1
        %s352 = scalar_lea.sflag [#allocation3], %s351
        %s353 = sand.u32 %s35, 1
        %s354 = smul.addr %s353, 8
        %s355 = scalar_lea.vmem [#allocation2], %s354
        %p356 = pneg %p48
        %p357 = pneg %p45
        %p358 = pneg %p69
        %p359 = pneg %p66
        %p360 = pneg %p90
        %p361 = pneg %p87
        %p362 = pneg %p111
        %p363 = pneg %p108
        %p364 = pneg %p132
        %p365 = pneg %p129
        %p366 = pneg %p153
        %p367 = pneg %p150
        %p368 = pneg %p174
        %p369 = pneg %p171
        %p370 = pneg %p195
        %p371 = pneg %p192
        %p372 = pneg %p221
        %p373 = pneg %p218
        %s374 = sand.u32 %s208, 1
        %s375 = scalar_lea.sflag [#allocation4], %s374
        %s376 = sand.u32 %s208, 1
        %s377 = smul.addr %s376, 8
        %s378 = scalar_lea.vmem [#allocation11], %s377
        %v379 = vld [vmem:[%s330] sm:$0xff]
        %v380 = vld [vmem:[%s1] sm:$0x1]
        %v381 = vld [vmem:[%s2] sm:$0x1]
        %vm382 = vcmask 261120
        %v383 = vsel %vm382, %v379, 0.0
        %384 = vadd.xlane.f32.xlu0 %v383
        %v385 = vpop.xlane.xlu0 %384
        %v386 = vrcp.pop 32.0
        %v387 = vmul.f32 %v385, %v386
        %v388 = vsub.f32 %v379, %v387
        %v389 = vmul.f32 %v388, %v388
        %v390 = vsel %vm382, %v389, 0.0
        %391 = vadd.xlane.f32.xlu0 %v390
        %v392 = vpop.xlane.xlu0 %391
        %v393 = vmul.f32 %v392, %v386
        %v394 = vadd.f32 %v393, 1e-05
        %v395 = vrsqrt.pop %v394
        %v396 = vmul.f32 %v388, %v395
        %v398 = vlaneseq
        %v399 = vshrl.u32 %v398, 7
        %v400 = vsub.s32 0, %v399
        %v401 = vrot.slane %v380, %v400
        %v403 = vmul.f32 %v396, %v401
        %v405 = vlaneseq
        %v406 = vshrl.u32 %v405, 7
        %v407 = vsub.s32 0, %v406
        %v408 = vrot.slane %v381, %v407
        %v410 = vadd.f32 %v403, %v408
        %v411 = vld [vmem:[#allocation5] sm:$0xff]
        %v412 = vld [vmem:[#allocation5 + $0x8] sm:$0xff]
        %v413 = vld [vmem:[#allocation5 + $0x10] sm:$0xff]
        %v414 = vld [vmem:[#allocation5 + $0x18] sm:$0xff]
        %v415 = vld [vmem:[#allocation7] sm:$0xff]
        %v416 = vld [vmem:[#allocation7 + $0x8] sm:$0xff]
        %v417 = vld [vmem:[#allocation7 + $0x10] sm:$0xff]
        %v418 = vld [vmem:[#allocation7 + $0x18] sm:$0xff]
        %v419 = vld [vmem:[#allocation8] sm:$0xff]
        %v420 = vld [vmem:[#allocation8 + $0x8] sm:$0xff]
        %v421 = vld [vmem:[#allocation8 + $0x10] sm:$0xff]
        %v422 = vld [vmem:[#allocation8 + $0x18] sm:$0xff]
        %v423 = vld [vmem:[#allocation10] sm:$0xff]
        %v424 = vld [vmem:[#allocation10 + $0x8] sm:$0xff]
        %v425 = vld [vmem:[#allocation10 + $0x10] sm:$0xff]
        %v426 = vld [vmem:[#allocation10 + $0x18] sm:$0xff]
        %v427 = vld [vmem:[%s7] sm:$0x1]
        %v429 = vsel %vm382, %v410, 0
        %431 = vmatprep.subr.mxu0 0.0
        %432 = vmatpush1.msra.mxu0 %v411
        %433 = vmatprep.subr.mxu0 0.0
        %434 = vmatpush1.msra.mxu0 %v412
        %435 = vmatprep.subr.mxu0 0.0
        %436 = vmatpush1.msra.mxu0 %v413
        %437 = vmatprep.subr.mxu0 0.0
        %438 = vmatpush1.msra.mxu0 %v414
        %439 = vmatprep.subr.mxu0 0.0
        %440 = vmatpush1.msra.mxu0 0.0
        %441 = vmatprep.subr.mxu0 0.0
        %442 = vmatpush1.msra.mxu0 0.0
        %443 = vmatprep.subr.mxu0 0.0
        %444 = vmatpush1.msra.mxu0 0.0
        %445 = vmatprep.subr.mxu0 0.0
        %446 = vmatpush1.msra.mxu0 0.0
        %447 = vmatprep.subr.mxu0 0.0
        %448 = vmatpush1.msra.mxu0 0.0
        %449 = vmatprep.subr.mxu0 0.0
        %450 = vmatpush1.msra.mxu0 0.0
        %451 = vmatprep.subr.mxu0 0.0
        %452 = vmatpush1.msra.mxu0 0.0
        %453 = vmatprep.subr.mxu0 0.0
        %454 = vmatpush1.msra.mxu0 0.0
        %455 = vmatprep.subr.mxu0 0.0
        %456 = vmatpush1.msra.mxu0 0.0
        %457 = vmatprep.subr.mxu0 0.0
        %458 = vmatpush1.msra.mxu0 0.0
        %459 = vmatprep.subr.mxu0 0.0
        %460 = vmatpush1.msra.mxu0 0.0
        %461 = vmatprep.subr.mxu0 0.0
        %462 = vmatpush1.msra.mxu0 0.0
        %463 = vmatprep.subr.mxu0 0.0
        %464 = vmatpush1.msra.mxu0 0.0
        %465 = vmatprep.subr.mxu0 0.0
        %466 = vmatpush1.msra.mxu0 0.0
        %467 = vmatprep.subr.mxu0 0.0
        %468 = vmatpush1.msra.mxu0 0.0
        %469 = vmatprep.subr.mxu0 0.0
        %470 = vmatpush1.msra.mxu0 0.0
        %471 = vmatprep.subr.mxu0 0.0
        %472 = vmatpush1.msra.mxu0 0.0
        %473 = vmatprep.subr.mxu0 0.0
        %474 = vmatpush1.msra.mxu0 0.0
        %475 = vmatprep.subr.mxu0 0.0
        %476 = vmatpush1.msra.mxu0 0.0
        %477 = vmatprep.subr.mxu0 0.0
        %478 = vmatpush1.msra.mxu0 0.0
        %479 = vmatprep.subr.mxu0 0.0
        %480 = vmatpush1.msra.mxu0 0.0
        %481 = vmatprep.subr.mxu0 0.0
        %482 = vmatpush1.msra.mxu0 0.0
        %483 = vmatprep.subr.mxu0 0.0
        %484 = vmatpush1.msra.mxu0 0.0
        %485 = vmatprep.subr.mxu0 0.0
        %486 = vmatpush1.msra.mxu0 0.0
        %487 = vmatprep.subr.mxu0 0.0
        %488 = vmatpush1.msra.mxu0 0.0
        %489 = vmatprep.subr.mxu0 0.0
        %490 = vmatpush1.msra.mxu0 0.0
        %491 = vmatprep.subr.mxu0 0.0
        %492 = vmatpush1.msra.mxu0 0.0
        %493 = vmatprep.subr.mxu0 0.0
        %494 = vmatpush1.msra.mxu0 0.0
        %495 = vmatprep.mubr.f32.mxu0 0.0
        %496 = vmatmul.mubr.f32.gmra.mrb[0].mxu0 %v429
        %v497 = vpop.f32.mrb[0].mxu0
        %v498 = vadd.f32 0.0, %v497
        %v499 = vpop.f32.mrb[0].mxu0
        %500 = vdwg.mxu0
        %v501 = vmul.f32 %v498, 0.35355338
        %502 = vmatprep.subr.mxu0 0.0
        %503 = vmatpush1.msra.mxu0 %v415
        %504 = vmatprep.subr.mxu0 0.0
        %505 = vmatpush1.msra.mxu0 %v416
        %506 = vmatprep.subr.mxu0 0.0
        %507 = vmatpush1.msra.mxu0 %v417
        %508 = vmatprep.subr.mxu0 0.0
        %509 = vmatpush1.msra.mxu0 %v418
        %510 = vmatprep.subr.mxu0 0.0
        %511 = vmatpush1.msra.mxu0 0.0
        %512 = vmatprep.subr.mxu0 0.0
        %513 = vmatpush1.msra.mxu0 0.0
        %514 = vmatprep.subr.mxu0 0.0
        %515 = vmatpush1.msra.mxu0 0.0
        %516 = vmatprep.subr.mxu0 0.0
        %517 = vmatpush1.msra.mxu0 0.0
        %518 = vmatprep.subr.mxu0 0.0
        %519 = vmatpush1.msra.mxu0 0.0
        %520 = vmatprep.subr.mxu0 0.0
        %521 = vmatpush1.msra.mxu0 0.0
        %522 = vmatprep.subr.mxu0 0.0
        %523 = vmatpush1.msra.mxu0 0.0
        %524 = vmatprep.subr.mxu0 0.0
        %525 = vmatpush1.msra.mxu0 0.0
        %526 = vmatprep.subr.mxu0 0.0
        %527 = vmatpush1.msra.mxu0 0.0
        %528 = vmatprep.subr.mxu0 0.0
        %529 = vmatpush1.msra.mxu0 0.0
        %530 = vmatprep.subr.mxu0 0.0
        %531 = vmatpush1.msra.mxu0 0.0
        %532 = vmatprep.subr.mxu0 0.0
        %533 = vmatpush1.msra.mxu0 0.0
        %534 = vmatprep.subr.mxu0 0.0
        %535 = vmatpush1.msra.mxu0 0.0
        %536 = vmatprep.subr.mxu0 0.0
        %537 = vmatpush1.msra.mxu0 0.0
        %538 = vmatprep.subr.mxu0 0.0
        %539 = vmatpush1.msra.mxu0 0.0
        %540 = vmatprep.subr.mxu0 0.0
        %541 = vmatpush1.msra.mxu0 0.0
        %542 = vmatprep.subr.mxu0 0.0
        %543 = vmatpush1.msra.mxu0 0.0
        %544 = vmatprep.subr.mxu0 0.0
        %545 = vmatpush1.msra.mxu0 0.0
        %546 = vmatprep.subr.mxu0 0.0
        %547 = vmatpush1.msra.mxu0 0.0
        %548 = vmatprep.subr.mxu0 0.0
        %549 = vmatpush1.msra.mxu0 0.0
        %550 = vmatprep.subr.mxu0 0.0
        %551 = vmatpush1.msra.mxu0 0.0
        %552 = vmatprep.subr.mxu0 0.0
        %553 = vmatpush1.msra.mxu0 0.0
        %554 = vmatprep.subr.mxu0 0.0
        %555 = vmatpush1.msra.mxu0 0.0
        %556 = vmatprep.subr.mxu0 0.0
        %557 = vmatpush1.msra.mxu0 0.0
        %558 = vmatprep.subr.mxu0 0.0
        %559 = vmatpush1.msra.mxu0 0.0
        %560 = vmatprep.subr.mxu0 0.0
        %561 = vmatpush1.msra.mxu0 0.0
        %562 = vmatprep.subr.mxu0 0.0
        %563 = vmatpush1.msra.mxu0 0.0
        %564 = vmatprep.subr.mxu0 0.0
        %565 = vmatpush1.msra.mxu0 0.0
        %566 = vmatprep.mubr.f32.mxu0 0.0
        %567 = vmatmul.mubr.f32.gmra.mrb[0].mxu0 %v429
        %v568 = vpop.f32.mrb[0].mxu0
        %v569 = vadd.f32 0.0, %v568
        %v570 = vpop.f32.mrb[0].mxu0
        %571 = vdwg.mxu0
        %572 = vmatprep.subr.mxu0 0.0
        %573 = vmatpush1.msra.mxu0 %v419
        %574 = vmatprep.subr.mxu0 0.0
        %575 = vmatpush1.msra.mxu0 %v420
        %576 = vmatprep.subr.mxu0 0.0
        %577 = vmatpush1.msra.mxu0 %v421
        %578 = vmatprep.subr.mxu0 0.0
        %579 = vmatpush1.msra.mxu0 %v422
        %580 = vmatprep.subr.mxu0 0.0
        %581 = vmatpush1.msra.mxu0 0.0
        %582 = vmatprep.subr.mxu0 0.0
        %583 = vmatpush1.msra.mxu0 0.0
        %584 = vmatprep.subr.mxu0 0.0
        %585 = vmatpush1.msra.mxu0 0.0
        %586 = vmatprep.subr.mxu0 0.0
        %587 = vmatpush1.msra.mxu0 0.0
        %588 = vmatprep.subr.mxu0 0.0
        %589 = vmatpush1.msra.mxu0 0.0
        %590 = vmatprep.subr.mxu0 0.0
        %591 = vmatpush1.msra.mxu0 0.0
        %592 = vmatprep.subr.mxu0 0.0
        %593 = vmatpush1.msra.mxu0 0.0
        %594 = vmatprep.subr.mxu0 0.0
        %595 = vmatpush1.msra.mxu0 0.0
        %596 = vmatprep.subr.mxu0 0.0
        %597 = vmatpush1.msra.mxu0 0.0
        %598 = vmatprep.subr.mxu0 0.0
        %599 = vmatpush1.msra.mxu0 0.0
        %600 = vmatprep.subr.mxu0 0.0
        %601 = vmatpush1.msra.mxu0 0.0
        %602 = vmatprep.subr.mxu0 0.0
        %603 = vmatpush1.msra.mxu0 0.0
        %604 = vmatprep.subr.mxu0 0.0
        %605 = vmatpush1.msra.mxu0 0.0
        %606 = vmatprep.subr.mxu0 0.0
        %607 = vmatpush1.msra.mxu0 0.0
        %608 = vmatprep.subr.mxu0 0.0
        %609 = vmatpush1.msra.mxu0 0.0
        %610 = vmatprep.subr.mxu0 0.0
        %611 = vmatpush1.msra.mxu0 0.0
        %612 = vmatprep.subr.mxu0 0.0
        %613 = vmatpush1.msra.mxu0 0.0
        %614 = vmatprep.subr.mxu0 0.0
        %615 = vmatpush1.msra.mxu0 0.0
        %616 = vmatprep.subr.mxu0 0.0
        %617 = vmatpush1.msra.mxu0 0.0
        %618 = vmatprep.subr.mxu0 0.0
        %619 = vmatpush1.msra.mxu0 0.0
        %620 = vmatprep.subr.mxu0 0.0
        %621 = vmatpush1.msra.mxu0 0.0
        %622 = vmatprep.subr.mxu0 0.0
        %623 = vmatpush1.msra.mxu0 0.0
        %624 = vmatprep.subr.mxu0 0.0
        %625 = vmatpush1.msra.mxu0 0.0
        %626 = vmatprep.subr.mxu0 0.0
        %627 = vmatpush1.msra.mxu0 0.0
        %628 = vmatprep.subr.mxu0 0.0
        %629 = vmatpush1.msra.mxu0 0.0
        %630 = vmatprep.subr.mxu0 0.0
        %631 = vmatpush1.msra.mxu0 0.0
        %632 = vmatprep.subr.mxu0 0.0
        %633 = vmatpush1.msra.mxu0 0.0
        %634 = vmatprep.subr.mxu0 0.0
        %635 = vmatpush1.msra.mxu0 0.0
        %636 = vmatprep.mubr.f32.mxu0 0.0
        %637 = vmatmul.mubr.f32.gmra.mrb[0].mxu0 %v429
        %v638 = vpop.f32.mrb[0].mxu0
        %v639 = vadd.f32 0.0, %v638
        %v640 = vpop.f32.mrb[0].mxu0
        %641 = vdwg.mxu0
        %vm642 = vcmask 64512
        %v644 = vsel %vm642, %v501, 0
        %v647 = vsel %vm642, %v569, 0
        %649 = vmatprep.subr.mxu0 0.0
        %650 = vmatpush1.xpose.msra.mxu0 %v647
        %651 = vmatprep.subr.mxu0 0.0
        %652 = vmatpush1.xpose.msra.mxu0 0.0
        %653 = vmatprep.subr.mxu0 0.0
        %654 = vmatpush1.xpose.msra.mxu0 0.0
        %655 = vmatprep.subr.mxu0 0.0
        %656 = vmatpush1.xpose.msra.mxu0 0.0
        %657 = vmatprep.subr.mxu0 0.0
        %658 = vmatpush1.xpose.msra.mxu0 0.0
        %659 = vmatprep.subr.mxu0 0.0
        %660 = vmatpush1.xpose.msra.mxu0 0.0
        %661 = vmatprep.subr.mxu0 0.0
        %662 = vmatpush1.xpose.msra.mxu0 0.0
        %663 = vmatprep.subr.mxu0 0.0
        %664 = vmatpush1.xpose.msra.mxu0 0.0
        %665 = vmatprep.subr.mxu0 0.0
        %666 = vmatpush1.xpose.msra.mxu0 0.0
        %667 = vmatprep.subr.mxu0 0.0
        %668 = vmatpush1.xpose.msra.mxu0 0.0
        %669 = vmatprep.subr.mxu0 0.0
        %670 = vmatpush1.xpose.msra.mxu0 0.0
        %671 = vmatprep.subr.mxu0 0.0
        %672 = vmatpush1.xpose.msra.mxu0 0.0
        %673 = vmatprep.subr.mxu0 0.0
        %674 = vmatpush1.xpose.msra.mxu0 0.0
        %675 = vmatprep.subr.mxu0 0.0
        %676 = vmatpush1.xpose.msra.mxu0 0.0
        %677 = vmatprep.subr.mxu0 0.0
        %678 = vmatpush1.xpose.msra.mxu0 0.0
        %679 = vmatprep.subr.mxu0 0.0
        %680 = vmatpush1.xpose.msra.mxu0 0.0
        %681 = vmatprep.subr.mxu0 0.0
        %682 = vmatpush1.xpose.msra.mxu0 0.0
        %683 = vmatprep.subr.mxu0 0.0
        %684 = vmatpush1.xpose.msra.mxu0 0.0
        %685 = vmatprep.subr.mxu0 0.0
        %686 = vmatpush1.xpose.msra.mxu0 0.0
        %687 = vmatprep.subr.mxu0 0.0
        %688 = vmatpush1.xpose.msra.mxu0 0.0
        %689 = vmatprep.subr.mxu0 0.0
        %690 = vmatpush1.xpose.msra.mxu0 0.0
        %691 = vmatprep.subr.mxu0 0.0
        %692 = vmatpush1.xpose.msra.mxu0 0.0
        %693 = vmatprep.subr.mxu0 0.0
        %694 = vmatpush1.xpose.msra.mxu0 0.0
        %695 = vmatprep.subr.mxu0 0.0
        %696 = vmatpush1.xpose.msra.mxu0 0.0
        %697 = vmatprep.subr.mxu0 0.0
        %698 = vmatpush1.xpose.msra.mxu0 0.0
        %699 = vmatprep.subr.mxu0 0.0
        %700 = vmatpush1.xpose.msra.mxu0 0.0
        %701 = vmatprep.subr.mxu0 0.0
        %702 = vmatpush1.xpose.msra.mxu0 0.0
        %703 = vmatprep.subr.mxu0 0.0
        %704 = vmatpush1.xpose.msra.mxu0 0.0
        %705 = vmatprep.subr.mxu0 0.0
        %706 = vmatpush1.xpose.msra.mxu0 0.0
        %707 = vmatprep.subr.mxu0 0.0
        %708 = vmatpush1.xpose.msra.mxu0 0.0
        %709 = vmatprep.subr.mxu0 0.0
        %710 = vmatpush1.xpose.msra.mxu0 0.0
        %711 = vmatprep.subr.mxu0 0.0
        %712 = vmatpush1.xpose.msra.mxu0 0.0
        %713 = vmatprep.mubr.f32.mxu0 0.0
        %714 = vmatmul.mubr.f32.gmra.mrb[0].mxu0 %v644
        %v715 = vpop.f32.mrb[0].mxu0
        %v716 = vadd.f32 0.0, %v715
        %v717 = vpop.f32.mrb[0].mxu0
        %718 = vdwg.mxu0
        %v719 = vsel %vm642, %v716, -inf
        %720 = vmax.xlane.f32.xlu0 %v719
        %v721 = vpop.xlane.xlu0 %720
        %v722 = vsub.f32 %v716, %v721
        %v723 = vmul.f32 %v722, 1.442695
        %v724 = vpow.pop %v723
        %v725 = vsel %vm642, %v724, 0.0
        %726 = vadd.xlane.f32.xlu0 %v725
        %v727 = vpop.xlane.xlu0 %726
        %v728 = vrcp.pop %v727
        %v729 = vmul.f32 %v724, %v728
        %v731 = vsel %vm642, %v729, 0
        %733 = vmatprep.subr.mxu0 0.0
        %734 = vmatpush1.msra.mxu0 %v639
        %735 = vmatprep.subr.mxu0 0.0
        %736 = vmatpush1.msra.mxu0 0.0
        %737 = vmatprep.subr.mxu0 0.0
        %738 = vmatpush1.msra.mxu0 0.0
        %739 = vmatprep.subr.mxu0 0.0
        %740 = vmatpush1.msra.mxu0 0.0
        %741 = vmatprep.subr.mxu0 0.0
        %742 = vmatpush1.msra.mxu0 0.0
        %743 = vmatprep.subr.mxu0 0.0
        %744 = vmatpush1.msra.mxu0 0.0
        %745 = vmatprep.subr.mxu0 0.0
        %746 = vmatpush1.msra.mxu0 0.0
        %747 = vmatprep.subr.mxu0 0.0
        %748 = vmatpush1.msra.mxu0 0.0
        %749 = vmatprep.subr.mxu0 0.0
        %750 = vmatpush1.msra.mxu0 0.0
        %751 = vmatprep.subr.mxu0 0.0
        %752 = vmatpush1.msra.mxu0 0.0
        %753 = vmatprep.subr.mxu0 0.0
        %754 = vmatpush1.msra.mxu0 0.0
        %755 = vmatprep.subr.mxu0 0.0
        %756 = vmatpush1.msra.mxu0 0.0
        %757 = vmatprep.subr.mxu0 0.0
        %758 = vmatpush1.msra.mxu0 0.0
        %759 = vmatprep.subr.mxu0 0.0
        %760 = vmatpush1.msra.mxu0 0.0
        %761 = vmatprep.subr.mxu0 0.0
        %762 = vmatpush1.msra.mxu0 0.0
        %763 = vmatprep.subr.mxu0 0.0
        %764 = vmatpush1.msra.mxu0 0.0
        %765 = vmatprep.subr.mxu0 0.0
        %766 = vmatpush1.msra.mxu0 0.0
        %767 = vmatprep.subr.mxu0 0.0
        %768 = vmatpush1.msra.mxu0 0.0
        %769 = vmatprep.subr.mxu0 0.0
        %770 = vmatpush1.msra.mxu0 0.0
        %771 = vmatprep.subr.mxu0 0.0
        %772 = vmatpush1.msra.mxu0 0.0
        %773 = vmatprep.subr.mxu0 0.0
        %774 = vmatpush1.msra.mxu0 0.0
        %775 = vmatprep.subr.mxu0 0.0
        %776 = vmatpush1.msra.mxu0 0.0
        %777 = vmatprep.subr.mxu0 0.0
        %778 = vmatpush1.msra.mxu0 0.0
        %779 = vmatprep.subr.mxu0 0.0
        %780 = vmatpush1.msra.mxu0 0.0
        %781 = vmatprep.subr.mxu0 0.0
        %782 = vmatpush1.msra.mxu0 0.0
        %783 = vmatprep.subr.mxu0 0.0
        %784 = vmatpush1.msra.mxu0 0.0
        %785 = vmatprep.subr.mxu0 0.0
        %786 = vmatpush1.msra.mxu0 0.0
        %787 = vmatprep.subr.mxu0 0.0
        %788 = vmatpush1.msra.mxu0 0.0
        %789 = vmatprep.subr.mxu0 0.0
        %790 = vmatpush1.msra.mxu0 0.0
        %791 = vmatprep.subr.mxu0 0.0
        %792 = vmatpush1.msra.mxu0 0.0
        %793 = vmatprep.subr.mxu0 0.0
        %794 = vmatpush1.msra.mxu0 0.0
        %795 = vmatprep.subr.mxu0 0.0
        %796 = vmatpush1.msra.mxu0 0.0
        %797 = vmatprep.mubr.f32.mxu0 0.0
        %798 = vmatmul.mubr.f32.gmra.mrb[0].mxu0 %v731
        %v799 = vpop.f32.mrb[0].mxu0
        %v800 = vadd.f32 0.0, %v799
        %v801 = vpop.f32.mrb[0].mxu0
        %802 = vdwg.mxu0
        %803 = vrot.lane.b32.xlu0 %v501, 120
        %v804 = vpop.permute.xlu0 %803
        %805 = vrot.lane.b32.xlu0 %v569, 120
        %v806 = vpop.permute.xlu0 %805
        %v807 = vsel %vm642, %v804, 0
        %v809 = vsel %vm642, %v806, 0
        %811 = vmatprep.subr.mxu0 0.0
        %812 = vmatpush1.xpose.msra.mxu0 %v809
        %813 = vmatprep.subr.mxu0 0.0
        %814 = vmatpush1.xpose.msra.mxu0 0.0
        %815 = vmatprep.subr.mxu0 0.0
        %816 = vmatpush1.xpose.msra.mxu0 0.0
        %817 = vmatprep.subr.mxu0 0.0
        %818 = vmatpush1.xpose.msra.mxu0 0.0
        %819 = vmatprep.subr.mxu0 0.0
        %820 = vmatpush1.xpose.msra.mxu0 0.0
        %821 = vmatprep.subr.mxu0 0.0
        %822 = vmatpush1.xpose.msra.mxu0 0.0
        %823 = vmatprep.subr.mxu0 0.0
        %824 = vmatpush1.xpose.msra.mxu0 0.0
        %825 = vmatprep.subr.mxu0 0.0
        %826 = vmatpush1.xpose.msra.mxu0 0.0
        %827 = vmatprep.subr.mxu0 0.0
        %828 = vmatpush1.xpose.msra.mxu0 0.0
        %829 = vmatprep.subr.mxu0 0.0
        %830 = vmatpush1.xpose.msra.mxu0 0.0
        %831 = vmatprep.subr.mxu0 0.0
        %832 = vmatpush1.xpose.msra.mxu0 0.0
        %833 = vmatprep.subr.mxu0 0.0
        %834 = vmatpush1.xpose.msra.mxu0 0.0
        %835 = vmatprep.subr.mxu0 0.0
        %836 = vmatpush1.xpose.msra.mxu0 0.0
        %837 = vmatprep.subr.mxu0 0.0
        %838 = vmatpush1.xpose.msra.mxu0 0.0
        %839 = vmatprep.subr.mxu0 0.0
        %840 = vmatpush1.xpose.msra.mxu0 0.0
        %841 = vmatprep.subr.mxu0 0.0
        %842 = vmatpush1.xpose.msra.mxu0 0.0
        %843 = vmatprep.subr.mxu0 0.0
        %844 = vmatpush1.xpose.msra.mxu0 0.0
        %845 = vmatprep.subr.mxu0 0.0
        %846 = vmatpush1.xpose.msra.mxu0 0.0
        %847 = vmatprep.subr.mxu0 0.0
        %848 = vmatpush1.xpose.msra.mxu0 0.0
        %849 = vmatprep.subr.mxu0 0.0
        %850 = vmatpush1.xpose.msra.mxu0 0.0
        %851 = vmatprep.subr.mxu0 0.0
        %852 = vmatpush1.xpose.msra.mxu0 0.0
        %853 = vmatprep.subr.mxu0 0.0
        %854 = vmatpush1.xpose.msra.mxu0 0.0
        %855 = vmatprep.subr.mxu0 0.0
        %856 = vmatpush1.xpose.msra.mxu0 0.0
        %857 = vmatprep.subr.mxu0 0.0
        %858 = vmatpush1.xpose.msra.mxu0 0.0
        %859 = vmatprep.subr.mxu0 0.0
        %860 = vmatpush1.xpose.msra.mxu0 0.0
        %861 = vmatprep.subr.mxu0 0.0
        %862 = vmatpush1.xpose.msra.mxu0 0.0
        %863 = vmatprep.subr.mxu0 0.0
        %864 = vmatpush1.xpose.msra.mxu0 0.0
        %865 = vmatprep.subr.mxu0 0.0
        %866 = vmatpush1.xpose.msra.mxu0 0.0
        %867 = vmatprep.subr.mxu0 0.0
        %868 = vmatpush1.xpose.msra.mxu0 0.0
        %869 = vmatprep.subr.mxu0 0.0
        %870 = vmatpush1.xpose.msra.mxu0 0.0
        %871 = vmatprep.subr.mxu0 0.0
        %872 = vmatpush1.xpose.msra.mxu0 0.0
        %873 = vmatprep.subr.mxu0 0.0
        %874 = vmatpush1.xpose.msra.mxu0 0.0
        %875 = vmatprep.mubr.f32.mxu0 0.0
        %876 = vmatmul.mubr.f32.gmra.mrb[0].mxu0 %v807
        %v877 = vpop.f32.mrb[0].mxu0
        %v878 = vadd.f32 0.0, %v877
        %v879 = vpop.f32.mrb[0].mxu0
        %880 = vdwg.mxu0
        %v881 = vsel %vm642, %v878, -inf
        %882 = vmax.xlane.f32.xlu0 %v881
        %v883 = vpop.xlane.xlu0 %882
        %v884 = vsub.f32 %v878, %v883
        %v885 = vmul.f32 %v884, 1.442695
        %v886 = vpow.pop %v885
        %v887 = vsel %vm642, %v886, 0.0
        %888 = vadd.xlane.f32.xlu0 %v887
        %v889 = vpop.xlane.xlu0 %888
        %v890 = vrcp.pop %v889
        %v891 = vmul.f32 %v886, %v890
        %893 = vrot.lane.b32.xlu0 %v639, 120
        %v894 = vpop.permute.xlu0 %893
        %v897 = vsel %vm642, %v891, 0
        %899 = vmatprep.subr.mxu0 0.0
        %900 = vmatpush1.msra.mxu0 %v894
        %901 = vmatprep.subr.mxu0 0.0
        %902 = vmatpush1.msra.mxu0 0.0
        %903 = vmatprep.subr.mxu0 0.0
        %904 = vmatpush1.msra.mxu0 0.0
        %905 = vmatprep.subr.mxu0 0.0
        %906 = vmatpush1.msra.mxu0 0.0
        %907 = vmatprep.subr.mxu0 0.0
        %908 = vmatpush1.msra.mxu0 0.0
        %909 = vmatprep.subr.mxu0 0.0
        %910 = vmatpush1.msra.mxu0 0.0
        %911 = vmatprep.subr.mxu0 0.0
        %912 = vmatpush1.msra.mxu0 0.0
        %913 = vmatprep.subr.mxu0 0.0
        %914 = vmatpush1.msra.mxu0 0.0
        %915 = vmatprep.subr.mxu0 0.0
        %916 = vmatpush1.msra.mxu0 0.0
        %917 = vmatprep.subr.mxu0 0.0
        %918 = vmatpush1.msra.mxu0 0.0
        %919 = vmatprep.subr.mxu0 0.0
        %920 = vmatpush1.msra.mxu0 0.0
        %921 = vmatprep.subr.mxu0 0.0
        %922 = vmatpush1.msra.mxu0 0.0
        %923 = vmatprep.subr.mxu0 0.0
        %924 = vmatpush1.msra.mxu0 0.0
        %925 = vmatprep.subr.mxu0 0.0
        %926 = vmatpush1.msra.mxu0 0.0
        %927 = vmatprep.subr.mxu0 0.0
        %928 = vmatpush1.msra.mxu0 0.0
        %929 = vmatprep.subr.mxu0 0.0
        %930 = vmatpush1.msra.mxu0 0.0
        %931 = vmatprep.subr.mxu0 0.0
        %932 = vmatpush1.msra.mxu0 0.0
        %933 = vmatprep.subr.mxu0 0.0
        %934 = vmatpush1.msra.mxu0 0.0
        %935 = vmatprep.subr.mxu0 0.0
        %936 = vmatpush1.msra.mxu0 0.0
        %937 = vmatprep.subr.mxu0 0.0
        %938 = vmatpush1.msra.mxu0 0.0
        %939 = vmatprep.subr.mxu0 0.0
        %940 = vmatpush1.msra.mxu0 0.0
        %941 = vmatprep.subr.mxu0 0.0
        %942 = vmatpush1.msra.mxu0 0.0
        %943 = vmatprep.subr.mxu0 0.0
        %944 = vmatpush1.msra.mxu0 0.0
        %945 = vmatprep.subr.mxu0 0.0
        %946 = vmatpush1.msra.mxu0 0.0
        %947 = vmatprep.subr.mxu0 0.0
        %948 = vmatpush1.msra.mxu0 0.0
        %949 = vmatprep.subr.mxu0 0.0
        %950 = vmatpush1.msra.mxu0 0.0
        %951 = vmatprep.subr.mxu0 0.0
        %952 = vmatpush1.msra.mxu0 0.0
        %953 = vmatprep.subr.mxu0 0.0
        %954 = vmatpush1.msra.mxu0 0.0
        %955 = vmatprep.subr.mxu0 0.0
        %956 = vmatpush1.msra.mxu0 0.0
        %957 = vmatprep.subr.mxu0 0.0
        %958 = vmatpush1.msra.mxu0 0.0
        %959 = vmatprep.subr.mxu0 0.0
        %960 = vmatpush1.msra.mxu0 0.0
        %961 = vmatprep.subr.mxu0 0.0
        %962 = vmatpush1.msra.mxu0 0.0
        %963 = vmatprep.mubr.f32.mxu0 0.0
        %964 = vmatmul.mubr.f32.gmra.mrb[0].mxu0 %v897
        %v965 = vpop.f32.mrb[0].mxu0
        %v966 = vadd.f32 0.0, %v965
        %v967 = vpop.f32.mrb[0].mxu0
        %968 = vdwg.mxu0
        %v970 = vsel %vm642, %v966, 0
        %972 = vmatprep.subr.mxu0 0.0
        %973 = vmatpush1.msra.mxu0 %v424
        %974 = vmatprep.subr.mxu0 0.0
        %975 = vmatpush1.msra.mxu0 0.0
        %976 = vmatprep.subr.mxu0 0.0
        %977 = vmatpush1.msra.mxu0 0.0
        %978 = vmatprep.subr.mxu0 0.0
        %979 = vmatpush1.msra.mxu0 0.0
        %980 = vmatprep.subr.mxu0 0.0
        %981 = vmatpush1.msra.mxu0 0.0
        %982 = vmatprep.subr.mxu0 0.0
        %983 = vmatpush1.msra.mxu0 0.0
        %984 = vmatprep.subr.mxu0 0.0
        %985 = vmatpush1.msra.mxu0 0.0
        %986 = vmatprep.subr.mxu0 0.0
        %987 = vmatpush1.msra.mxu0 0.0
        %988 = vmatprep.subr.mxu0 0.0
        %989 = vmatpush1.msra.mxu0 0.0
        %990 = vmatprep.subr.mxu0 0.0
        %991 = vmatpush1.msra.mxu0 0.0
        %992 = vmatprep.subr.mxu0 0.0
        %993 = vmatpush1.msra.mxu0 0.0
        %994 = vmatprep.subr.mxu0 0.0
        %995 = vmatpush1.msra.mxu0 0.0
        %996 = vmatprep.subr.mxu0 0.0
        %997 = vmatpush1.msra.mxu0 0.0
        %998 = vmatprep.subr.mxu0 0.0
        %999 = vmatpush1.msra.mxu0 0.0
        %1000 = vmatprep.subr.mxu0 0.0
        %1001 = vmatpush1.msra.mxu0 0.0
        %1002 = vmatprep.subr.mxu0 0.0
        %1003 = vmatpush1.msra.mxu0 0.0
        %1004 = vmatprep.subr.mxu0 0.0
        %1005 = vmatpush1.msra.mxu0 0.0
        %1006 = vmatprep.subr.mxu0 0.0
        %1007 = vmatpush1.msra.mxu0 0.0
        %1008 = vmatprep.subr.mxu0 0.0
        %1009 = vmatpush1.msra.mxu0 0.0
        %1010 = vmatprep.subr.mxu0 0.0
        %1011 = vmatpush1.msra.mxu0 0.0
        %1012 = vmatprep.subr.mxu0 0.0
        %1013 = vmatpush1.msra.mxu0 0.0
        %1014 = vmatprep.subr.mxu0 0.0
        %1015 = vmatpush1.msra.mxu0 0.0
        %1016 = vmatprep.subr.mxu0 0.0
        %1017 = vmatpush1.msra.mxu0 0.0
        %1018 = vmatprep.subr.mxu0 0.0
        %1019 = vmatpush1.msra.mxu0 0.0
        %1020 = vmatprep.subr.mxu0 0.0
        %1021 = vmatpush1.msra.mxu0 0.0
        %1022 = vmatprep.subr.mxu0 0.0
        %1023 = vmatpush1.msra.mxu0 0.0
        %1024 = vmatprep.subr.mxu0 0.0
        %1025 = vmatpush1.msra.mxu0 0.0
        %1026 = vmatprep.subr.mxu0 0.0
        %1027 = vmatpush1.msra.mxu0 0.0
        %1028 = vmatprep.subr.mxu0 0.0
        %1029 = vmatpush1.msra.mxu0 0.0
        %1030 = vmatprep.subr.mxu0 0.0
        %1031 = vmatpush1.msra.mxu0 0.0
        %1032 = vmatprep.subr.mxu0 0.0
        %1033 = vmatpush1.msra.mxu0 0.0
        %1034 = vmatprep.subr.mxu0 0.0
        %1035 = vmatpush1.msra.mxu0 0.0
        %1036 = vmatprep.mubr.f32.mxu0 0.0
        %1037 = vmatmul.mubr.f32.gmra.mrb[0].mxu0 %v970
        %v1038 = vpop.f32.mrb[0].mxu0
        %v1039 = vadd.f32 0.0, %v1038
        %v1040 = vpop.f32.mrb[0].mxu0
        %1041 = vdwg.mxu0
        %v1043 = vsel %vm642, %v800, 0
        %1045 = vmatprep.subr.mxu0 0.0
        %1046 = vmatpush1.msra.mxu0 %v423
        %1047 = vmatprep.subr.mxu0 0.0
        %1048 = vmatpush1.msra.mxu0 0.0
        %1049 = vmatprep.subr.mxu0 0.0
        %1050 = vmatpush1.msra.mxu0 0.0
        %1051 = vmatprep.subr.mxu0 0.0
        %1052 = vmatpush1.msra.mxu0 0.0
        %1053 = vmatprep.subr.mxu0 0.0
        %1054 = vmatpush1.msra.mxu0 0.0
        %1055 = vmatprep.subr.mxu0 0.0
        %1056 = vmatpush1.msra.mxu0 0.0
        %1057 = vmatprep.subr.mxu0 0.0
        %1058 = vmatpush1.msra.mxu0 0.0
        %1059 = vmatprep.subr.mxu0 0.0
        %1060 = vmatpush1.msra.mxu0 0.0
        %1061 = vmatprep.subr.mxu0 0.0
        %1062 = vmatpush1.msra.mxu0 0.0
        %1063 = vmatprep.subr.mxu0 0.0
        %1064 = vmatpush1.msra.mxu0 0.0
        %1065 = vmatprep.subr.mxu0 0.0
        %1066 = vmatpush1.msra.mxu0 0.0
        %1067 = vmatprep.subr.mxu0 0.0
        %1068 = vmatpush1.msra.mxu0 0.0
        %1069 = vmatprep.subr.mxu0 0.0
        %1070 = vmatpush1.msra.mxu0 0.0
        %1071 = vmatprep.subr.mxu0 0.0
        %1072 = vmatpush1.msra.mxu0 0.0
        %1073 = vmatprep.subr.mxu0 0.0
        %1074 = vmatpush1.msra.mxu0 0.0
        %1075 = vmatprep.subr.mxu0 0.0
        %1076 = vmatpush1.msra.mxu0 0.0
        %1077 = vmatprep.subr.mxu0 0.0
        %1078 = vmatpush1.msra.mxu0 0.0
        %1079 = vmatprep.subr.mxu0 0.0
        %1080 = vmatpush1.msra.mxu0 0.0
        %1081 = vmatprep.subr.mxu0 0.0
        %1082 = vmatpush1.msra.mxu0 0.0
        %1083 = vmatprep.subr.mxu0 0.0
        %1084 = vmatpush1.msra.mxu0 0.0
        %1085 = vmatprep.subr.mxu0 0.0
        %1086 = vmatpush1.msra.mxu0 0.0
        %1087 = vmatprep.subr.mxu0 0.0
        %1088 = vmatpush1.msra.mxu0 0.0
        %1089 = vmatprep.subr.mxu0 0.0
        %1090 = vmatpush1.msra.mxu0 0.0
        %1091 = vmatprep.subr.mxu0 0.0
        %1092 = vmatpush1.msra.mxu0 0.0
        %1093 = vmatprep.subr.mxu0 0.0
        %1094 = vmatpush1.msra.mxu0 0.0
        %1095 = vmatprep.subr.mxu0 0.0
        %1096 = vmatpush1.msra.mxu0 0.0
        %1097 = vmatprep.subr.mxu0 0.0
        %1098 = vmatpush1.msra.mxu0 0.0
        %1099 = vmatprep.subr.mxu0 0.0
        %1100 = vmatpush1.msra.mxu0 0.0
        %1101 = vmatprep.subr.mxu0 0.0
        %1102 = vmatpush1.msra.mxu0 0.0
        %1103 = vmatprep.subr.mxu0 0.0
        %1104 = vmatpush1.msra.mxu0 0.0
        %1105 = vmatprep.subr.mxu0 0.0
        %1106 = vmatpush1.msra.mxu0 0.0
        %1107 = vmatprep.subr.mxu0 0.0
        %1108 = vmatpush1.msra.mxu0 0.0
        %1109 = vmatprep.mubr.f32.mxu0 0.0
        %1110 = vmatmul.mubr.f32.gmra.mrb[0].mxu0 %v1043
        %v1111 = vpop.f32.mrb[0].mxu0
        %v1112 = vadd.f32 %v1039, %v1111
        %v1113 = vpop.f32.mrb[0].mxu0
        %1114 = vdwg.mxu0
        %1115 = vrot.lane.b32.xlu0 %v501, 112
        %v1116 = vpop.permute.xlu0 %1115
        %1117 = vrot.lane.b32.xlu0 %v569, 112
        %v1118 = vpop.permute.xlu0 %1117
        %v1119 = vsel %vm642, %v1116, 0
        %v1121 = vsel %vm642, %v1118, 0
        %1123 = vmatprep.subr.mxu0 0.0
        %1124 = vmatpush1.xpose.msra.mxu0 %v1121
        %1125 = vmatprep.subr.mxu0 0.0
        %1126 = vmatpush1.xpose.msra.mxu0 0.0
        %1127 = vmatprep.subr.mxu0 0.0
        %1128 = vmatpush1.xpose.msra.mxu0 0.0
        %1129 = vmatprep.subr.mxu0 0.0
        %1130 = vmatpush1.xpose.msra.mxu0 0.0
        %1131 = vmatprep.subr.mxu0 0.0
        %1132 = vmatpush1.xpose.msra.mxu0 0.0
        %1133 = vmatprep.subr.mxu0 0.0
        %1134 = vmatpush1.xpose.msra.mxu0 0.0
        %1135 = vmatprep.subr.mxu0 0.0
        %1136 = vmatpush1.xpose.msra.mxu0 0.0
        %1137 = vmatprep.subr.mxu0 0.0
        %1138 = vmatpush1.xpose.msra.mxu0 0.0
        %1139 = vmatprep.subr.mxu0 0.0
        %1140 = vmatpush1.xpose.msra.mxu0 0.0
        %1141 = vmatprep.subr.mxu0 0.0
        %1142 = vmatpush1.xpose.msra.mxu0 0.0
        %1143 = vmatprep.subr.mxu0 0.0
        %1144 = vmatpush1.xpose.msra.mxu0 0.0
        %1145 = vmatprep.subr.mxu0 0.0
        %1146 = vmatpush1.xpose.msra.mxu0 0.0
        %1147 = vmatprep.subr.mxu0 0.0
        %1148 = vmatpush1.xpose.msra.mxu0 0.0
        %1149 = vmatprep.subr.mxu0 0.0
        %1150 = vmatpush1.xpose.msra.mxu0 0.0
        %1151 = vmatprep.subr.mxu0 0.0
        %1152 = vmatpush1.xpose.msra.mxu0 0.0
        %1153 = vmatprep.subr.mxu0 0.0
        %1154 = vmatpush1.xpose.msra.mxu0 0.0
        %1155 = vmatprep.subr.mxu0 0.0
        %1156 = vmatpush1.xpose.msra.mxu0 0.0
        %1157 = vmatprep.subr.mxu0 0.0
        %1158 = vmatpush1.xpose.msra.mxu0 0.0
        %1159 = vmatprep.subr.mxu0 0.0
        %1160 = vmatpush1.xpose.msra.mxu0 0.0
        %1161 = vmatprep.subr.mxu0 0.0
        %1162 = vmatpush1.xpose.msra.mxu0 0.0
        %1163 = vmatprep.subr.mxu0 0.0
        %1164 = vmatpush1.xpose.msra.mxu0 0.0
        %1165 = vmatprep.subr.mxu0 0.0
        %1166 = vmatpush1.xpose.msra.mxu0 0.0
        %1167 = vmatprep.subr.mxu0 0.0
        %1168 = vmatpush1.xpose.msra.mxu0 0.0
        %1169 = vmatprep.subr.mxu0 0.0
        %1170 = vmatpush1.xpose.msra.mxu0 0.0
        %1171 = vmatprep.subr.mxu0 0.0
        %1172 = vmatpush1.xpose.msra.mxu0 0.0
        %1173 = vmatprep.subr.mxu0 0.0
        %1174 = vmatpush1.xpose.msra.mxu0 0.0
        %1175 = vmatprep.subr.mxu0 0.0
        %1176 = vmatpush1.xpose.msra.mxu0 0.0
        %1177 = vmatprep.subr.mxu0 0.0
        %1178 = vmatpush1.xpose.msra.mxu0 0.0
        %1179 = vmatprep.subr.mxu0 0.0
        %1180 = vmatpush1.xpose.msra.mxu0 0.0
        %1181 = vmatprep.subr.mxu0 0.0
        %1182 = vmatpush1.xpose.msra.mxu0 0.0
        %1183 = vmatprep.subr.mxu0 0.0
        %1184 = vmatpush1.xpose.msra.mxu0 0.0
        %1185 = vmatprep.subr.mxu0 0.0
        %1186 = vmatpush1.xpose.msra.mxu0 0.0
        %1187 = vmatprep.mubr.f32.mxu0 0.0
        %1188 = vmatmul.mubr.f32.gmra.mrb[0].mxu0 %v1119
        %v1189 = vpop.f32.mrb[0].mxu0
        %v1190 = vadd.f32 0.0, %v1189
        %v1191 = vpop.f32.mrb[0].mxu0
        %1192 = vdwg.mxu0
        %v1193 = vsel %vm642, %v1190, -inf
        %1194 = vmax.xlane.f32.xlu0 %v1193
        %v1195 = vpop.xlane.xlu0 %1194
        %v1196 = vsub.f32 %v1190, %v1195
        %v1197 = vmul.f32 %v1196, 1.442695
        %v1198 = vpow.pop %v1197
        %v1199 = vsel %vm642, %v1198, 0.0
        %1200 = vadd.xlane.f32.xlu0 %v1199
        %v1201 = vpop.xlane.xlu0 %1200
        %v1202 = vrcp.pop %v1201
        %v1203 = vmul.f32 %v1198, %v1202
        %1204 = vrot.lane.b32.xlu0 %v639, 112
        %v1205 = vpop.permute.xlu0 %1204
        %v1208 = vsel %vm642, %v1203, 0
        %1210 = vmatprep.subr.mxu0 0.0
        %1211 = vmatpush1.msra.mxu0 %v1205
        %1212 = vmatprep.subr.mxu0 0.0
        %1213 = vmatpush1.msra.mxu0 0.0
        %1214 = vmatprep.subr.mxu0 0.0
        %1215 = vmatpush1.msra.mxu0 0.0
        %1216 = vmatprep.subr.mxu0 0.0
        %1217 = vmatpush1.msra.mxu0 0.0
        %1218 = vmatprep.subr.mxu0 0.0
        %1219 = vmatpush1.msra.mxu0 0.0
        %1220 = vmatprep.subr.mxu0 0.0
        %1221 = vmatpush1.msra.mxu0 0.0
        %1222 = vmatprep.subr.mxu0 0.0
        %1223 = vmatpush1.msra.mxu0 0.0
        %1224 = vmatprep.subr.mxu0 0.0
        %1225 = vmatpush1.msra.mxu0 0.0
        %1226 = vmatprep.subr.mxu0 0.0
        %1227 = vmatpush1.msra.mxu0 0.0
        %1228 = vmatprep.subr.mxu0 0.0
        %1229 = vmatpush1.msra.mxu0 0.0
        %1230 = vmatprep.subr.mxu0 0.0
        %1231 = vmatpush1.msra.mxu0 0.0
        %1232 = vmatprep.subr.mxu0 0.0
        %1233 = vmatpush1.msra.mxu0 0.0
        %1234 = vmatprep.subr.mxu0 0.0
        %1235 = vmatpush1.msra.mxu0 0.0
        %1236 = vmatprep.subr.mxu0 0.0
        %1237 = vmatpush1.msra.mxu0 0.0
        %1238 = vmatprep.subr.mxu0 0.0
        %1239 = vmatpush1.msra.mxu0 0.0
        %1240 = vmatprep.subr.mxu0 0.0
        %1241 = vmatpush1.msra.mxu0 0.0
        %1242 = vmatprep.subr.mxu0 0.0
        %1243 = vmatpush1.msra.mxu0 0.0
        %1244 = vmatprep.subr.mxu0 0.0
        %1245 = vmatpush1.msra.mxu0 0.0
        %1246 = vmatprep.subr.mxu0 0.0
        %1247 = vmatpush1.msra.mxu0 0.0
        %1248 = vmatprep.subr.mxu0 0.0
        %1249 = vmatpush1.msra.mxu0 0.0
        %1250 = vmatprep.subr.mxu0 0.0
        %1251 = vmatpush1.msra.mxu0 0.0
        %1252 = vmatprep.subr.mxu0 0.0
        %1253 = vmatpush1.msra.mxu0 0.0
        %1254 = vmatprep.subr.mxu0 0.0
        %1255 = vmatpush1.msra.mxu0 0.0
        %1256 = vmatprep.subr.mxu0 0.0
        %1257 = vmatpush1.msra.mxu0 0.0
        %1258 = vmatprep.subr.mxu0 0.0
        %1259 = vmatpush1.msra.mxu0 0.0
        %1260 = vmatprep.subr.mxu0 0.0
        %1261 = vmatpush1.msra.mxu0 0.0
        %1262 = vmatprep.subr.mxu0 0.0
        %1263 = vmatpush1.msra.mxu0 0.0
        %1264 = vmatprep.subr.mxu0 0.0
        %1265 = vmatpush1.msra.mxu0 0.0
        %1266 = vmatprep.subr.mxu0 0.0
        %1267 = vmatpush1.msra.mxu0 0.0
        %1268 = vmatprep.subr.mxu0 0.0
        %1269 = vmatpush1.msra.mxu0 0.0
        %1270 = vmatprep.subr.mxu0 0.0
        %1271 = vmatpush1.msra.mxu0 0.0
        %1272 = vmatprep.subr.mxu0 0.0
        %1273 = vmatpush1.msra.mxu0 0.0
        %1274 = vmatprep.mubr.f32.mxu0 0.0
        %1275 = vmatmul.mubr.f32.gmra.mrb[0].mxu0 %v1208
        %v1276 = vpop.f32.mrb[0].mxu0
        %v1277 = vadd.f32 0.0, %v1276
        %v1278 = vpop.f32.mrb[0].mxu0
        %1279 = vdwg.mxu0
        %v1281 = vsel %vm642, %v1277, 0
        %1283 = vmatprep.subr.mxu0 0.0
        %1284 = vmatpush1.msra.mxu0 %v425
        %1285 = vmatprep.subr.mxu0 0.0
        %1286 = vmatpush1.msra.mxu0 0.0
        %1287 = vmatprep.subr.mxu0 0.0
        %1288 = vmatpush1.msra.mxu0 0.0
        %1289 = vmatprep.subr.mxu0 0.0
        %1290 = vmatpush1.msra.mxu0 0.0
        %1291 = vmatprep.subr.mxu0 0.0
        %1292 = vmatpush1.msra.mxu0 0.0
        %1293 = vmatprep.subr.mxu0 0.0
        %1294 = vmatpush1.msra.mxu0 0.0
        %1295 = vmatprep.subr.mxu0 0.0
        %1296 = vmatpush1.msra.mxu0 0.0
        %1297 = vmatprep.subr.mxu0 0.0
        %1298 = vmatpush1.msra.mxu0 0.0
        %1299 = vmatprep.subr.mxu0 0.0
        %1300 = vmatpush1.msra.mxu0 0.0
        %1301 = vmatprep.subr.mxu0 0.0
        %1302 = vmatpush1.msra.mxu0 0.0
        %1303 = vmatprep.subr.mxu0 0.0
        %1304 = vmatpush1.msra.mxu0 0.0
        %1305 = vmatprep.subr.mxu0 0.0
        %1306 = vmatpush1.msra.mxu0 0.0
        %1307 = vmatprep.subr.mxu0 0.0
        %1308 = vmatpush1.msra.mxu0 0.0
        %1309 = vmatprep.subr.mxu0 0.0
        %1310 = vmatpush1.msra.mxu0 0.0
        %1311 = vmatprep.subr.mxu0 0.0
        %1312 = vmatpush1.msra.mxu0 0.0
        %1313 = vmatprep.subr.mxu0 0.0
        %1314 = vmatpush1.msra.mxu0 0.0
        %1315 = vmatprep.subr.mxu0 0.0
        %1316 = vmatpush1.msra.mxu0 0.0
        %1317 = vmatprep.subr.mxu0 0.0
        %1318 = vmatpush1.msra.mxu0 0.0
        %1319 = vmatprep.subr.mxu0 0.0
        %1320 = vmatpush1.msra.mxu0 0.0
        %1321 = vmatprep.subr.mxu0 0.0
        %1322 = vmatpush1.msra.mxu0 0.0
        %1323 = vmatprep.subr.mxu0 0.0
        %1324 = vmatpush1.msra.mxu0 0.0
        %1325 = vmatprep.subr.mxu0 0.0
        %1326 = vmatpush1.msra.mxu0 0.0
        %1327 = vmatprep.subr.mxu0 0.0
        %1328 = vmatpush1.msra.mxu0 0.0
        %1329 = vmatprep.subr.mxu0 0.0
        %1330 = vmatpush1.msra.mxu0 0.0
        %1331 = vmatprep.subr.mxu0 0.0
        %1332 = vmatpush1.msra.mxu0 0.0
        %1333 = vmatprep.subr.mxu0 0.0
        %1334 = vmatpush1.msra.mxu0 0.0
        %1335 = vmatprep.subr.mxu0 0.0
        %1336 = vmatpush1.msra.mxu0 0.0
        %1337 = vmatprep.subr.mxu0 0.0
        %1338 = vmatpush1.msra.mxu0 0.0
        %1339 = vmatprep.subr.mxu0 0.0
        %1340 = vmatpush1.msra.mxu0 0.0
        %1341 = vmatprep.subr.mxu0 0.0
        %1342 = vmatpush1.msra.mxu0 0.0
        %1343 = vmatprep.subr.mxu0 0.0
        %1344 = vmatpush1.msra.mxu0 0.0
        %1345 = vmatprep.subr.mxu0 0.0
        %1346 = vmatpush1.msra.mxu0 0.0
        %1347 = vmatprep.mubr.f32.mxu0 0.0
        %1348 = vmatmul.mubr.f32.gmra.mrb[0].mxu0 %v1281
        %v1349 = vpop.f32.mrb[0].mxu0
        %v1350 = vadd.f32 0.0, %v1349
        %v1351 = vpop.f32.mrb[0].mxu0
        %1352 = vdwg.mxu0
        %v1353 = vadd.f32 %v1112, %v1350
        %1354 = vrot.lane.b32.xlu0 %v501, 104
        %v1355 = vpop.permute.xlu0 %1354
        %1356 = vrot.lane.b32.xlu0 %v569, 104
        %v1357 = vpop.permute.xlu0 %1356
        %v1358 = vsel %vm642, %v1355, 0
        %v1360 = vsel %vm642, %v1357, 0
        %1362 = vmatprep.subr.mxu0 0.0
        %1363 = vmatpush1.xpose.msra.mxu0 %v1360
        %1364 = vmatprep.subr.mxu0 0.0
        %1365 = vmatpush1.xpose.msra.mxu0 0.0
        %1366 = vmatprep.subr.mxu0 0.0
        %1367 = vmatpush1.xpose.msra.mxu0 0.0
        %1368 = vmatprep.subr.mxu0 0.0
        %1369 = vmatpush1.xpose.msra.mxu0 0.0
        %1370 = vmatprep.subr.mxu0 0.0
        %1371 = vmatpush1.xpose.msra.mxu0 0.0
        %1372 = vmatprep.subr.mxu0 0.0
        %1373 = vmatpush1.xpose.msra.mxu0 0.0
        %1374 = vmatprep.subr.mxu0 0.0
        %1375 = vmatpush1.xpose.msra.mxu0 0.0
        %1376 = vmatprep.subr.mxu0 0.0
        %1377 = vmatpush1.xpose.msra.mxu0 0.0
        %1378 = vmatprep.subr.mxu0 0.0
        %1379 = vmatpush1.xpose.msra.mxu0 0.0
        %1380 = vmatprep.subr.mxu0 0.0
        %1381 = vmatpush1.xpose.msra.mxu0 0.0
        %1382 = vmatprep.subr.mxu0 0.0
        %1383 = vmatpush1.xpose.msra.mxu0 0.0
        %1384 = vmatprep.subr.mxu0 0.0
        %1385 = vmatpush1.xpose.msra.mxu0 0.0
        %1386 = vmatprep.subr.mxu0 0.0
        %1387 = vmatpush1.xpose.msra.mxu0 0.0
        %1388 = vmatprep.subr.mxu0 0.0
        %1389 = vmatpush1.xpose.msra.mxu0 0.0
        %1390 = vmatprep.subr.mxu0 0.0
        %1391 = vmatpush1.xpose.msra.mxu0 0.0
        %1392 = vmatprep.subr.mxu0 0.0
        %1393 = vmatpush1.xpose.msra.mxu0 0.0
        %1394 = vmatprep.subr.mxu0 0.0
        %1395 = vmatpush1.xpose.msra.mxu0 0.0
        %1396 = vmatprep.subr.mxu0 0.0
        %1397 = vmatpush1.xpose.msra.mxu0 0.0
        %1398 = vmatprep.subr.mxu0 0.0
        %1399 = vmatpush1.xpose.msra.mxu0 0.0
        %1400 = vmatprep.subr.mxu0 0.0
        %1401 = vmatpush1.xpose.msra.mxu0 0.0
        %1402 = vmatprep.subr.mxu0 0.0
        %1403 = vmatpush1.xpose.msra.mxu0 0.0
        %1404 = vmatprep.subr.mxu0 0.0
        %1405 = vmatpush1.xpose.msra.mxu0 0.0
        %1406 = vmatprep.subr.mxu0 0.0
        %1407 = vmatpush1.xpose.msra.mxu0 0.0
        %1408 = vmatprep.subr.mxu0 0.0
        %1409 = vmatpush1.xpose.msra.mxu0 0.0
        %1410 = vmatprep.subr.mxu0 0.0
        %1411 = vmatpush1.xpose.msra.mxu0 0.0
        %1412 = vmatprep.subr.mxu0 0.0
        %1413 = vmatpush1.xpose.msra.mxu0 0.0
        %1414 = vmatprep.subr.mxu0 0.0
        %1415 = vmatpush1.xpose.msra.mxu0 0.0
        %1416 = vmatprep.subr.mxu0 0.0
        %1417 = vmatpush1.xpose.msra.mxu0 0.0
        %1418 = vmatprep.subr.mxu0 0.0
        %1419 = vmatpush1.xpose.msra.mxu0 0.0
        %1420 = vmatprep.subr.mxu0 0.0
        %1421 = vmatpush1.xpose.msra.mxu0 0.0
        %1422 = vmatprep.subr.mxu0 0.0
        %1423 = vmatpush1.xpose.msra.mxu0 0.0
        %1424 = vmatprep.subr.mxu0 0.0
        %1425 = vmatpush1.xpose.msra.mxu0 0.0
        %1426 = vmatprep.mubr.f32.mxu0 0.0
        %1427 = vmatmul.mubr.f32.gmra.mrb[0].mxu0 %v1358
        %v1428 = vpop.f32.mrb[0].mxu0
        %v1429 = vadd.f32 0.0, %v1428
        %v1430 = vpop.f32.mrb[0].mxu0
        %1431 = vdwg.mxu0
        %v1432 = vsel %vm642, %v1429, -inf
        %1433 = vmax.xlane.f32.xlu0 %v1432
        %v1434 = vpop.xlane.xlu0 %1433
        %v1435 = vsub.f32 %v1429, %v1434
        %v1436 = vmul.f32 %v1435, 1.442695
        %v1437 = vpow.pop %v1436
        %v1438 = vsel %vm642, %v1437, 0.0
        %1439 = vadd.xlane.f32.xlu0 %v1438
        %v1440 = vpop.xlane.xlu0 %1439
        %v1441 = vrcp.pop %v1440
        %v1442 = vmul.f32 %v1437, %v1441
        %1443 = vrot.lane.b32.xlu0 %v639, 104
        %v1444 = vpop.permute.xlu0 %1443
        %v1447 = vsel %vm642, %v1442, 0
        %1449 = vmatprep.subr.mxu0 0.0
        %1450 = vmatpush1.msra.mxu0 %v1444
        %1451 = vmatprep.subr.mxu0 0.0
        %1452 = vmatpush1.msra.mxu0 0.0
        %1453 = vmatprep.subr.mxu0 0.0
        %1454 = vmatpush1.msra.mxu0 0.0
        %1455 = vmatprep.subr.mxu0 0.0
        %1456 = vmatpush1.msra.mxu0 0.0
        %1457 = vmatprep.subr.mxu0 0.0
        %1458 = vmatpush1.msra.mxu0 0.0
        %1459 = vmatprep.subr.mxu0 0.0
        %1460 = vmatpush1.msra.mxu0 0.0
        %1461 = vmatprep.subr.mxu0 0.0
        %1462 = vmatpush1.msra.mxu0 0.0
        %1463 = vmatprep.subr.mxu0 0.0
        %1464 = vmatpush1.msra.mxu0 0.0
        %1465 = vmatprep.subr.mxu0 0.0
        %1466 = vmatpush1.msra.mxu0 0.0
        %1467 = vmatprep.subr.mxu0 0.0
        %1468 = vmatpush1.msra.mxu0 0.0
        %1469 = vmatprep.subr.mxu0 0.0
        %1470 = vmatpush1.msra.mxu0 0.0
        %1471 = vmatprep.subr.mxu0 0.0
        %1472 = vmatpush1.msra.mxu0 0.0
        %1473 = vmatprep.subr.mxu0 0.0
        %1474 = vmatpush1.msra.mxu0 0.0
        %1475 = vmatprep.subr.mxu0 0.0
        %1476 = vmatpush1.msra.mxu0 0.0
        %1477 = vmatprep.subr.mxu0 0.0
        %1478 = vmatpush1.msra.mxu0 0.0
        %1479 = vmatprep.subr.mxu0 0.0
        %1480 = vmatpush1.msra.mxu0 0.0
        %1481 = vmatprep.subr.mxu0 0.0
        %1482 = vmatpush1.msra.mxu0 0.0
        %1483 = vmatprep.subr.mxu0 0.0
        %1484 = vmatpush1.msra.mxu0 0.0
        %1485 = vmatprep.subr.mxu0 0.0
        %1486 = vmatpush1.msra.mxu0 0.0
        %1487 = vmatprep.subr.mxu0 0.0
        %1488 = vmatpush1.msra.mxu0 0.0
        %1489 = vmatprep.subr.mxu0 0.0
        %1490 = vmatpush1.msra.mxu0 0.0
        %1491 = vmatprep.subr.mxu0 0.0
        %1492 = vmatpush1.msra.mxu0 0.0
        %1493 = vmatprep.subr.mxu0 0.0
        %1494 = vmatpush1.msra.mxu0 0.0
        %1495 = vmatprep.subr.mxu0 0.0
        %1496 = vmatpush1.msra.mxu0 0.0
        %1497 = vmatprep.subr.mxu0 0.0
        %1498 = vmatpush1.msra.mxu0 0.0
        %1499 = vmatprep.subr.mxu0 0.0
        %1500 = vmatpush1.msra.mxu0 0.0
        %1501 = vmatprep.subr.mxu0 0.0
        %1502 = vmatpush1.msra.mxu0 0.0
        %1503 = vmatprep.subr.mxu0 0.0
        %1504 = vmatpush1.msra.mxu0 0.0
        %1505 = vmatprep.subr.mxu0 0.0
        %1506 = vmatpush1.msra.mxu0 0.0
        %1507 = vmatprep.subr.mxu0 0.0
        %1508 = vmatpush1.msra.mxu0 0.0
        %1509 = vmatprep.subr.mxu0 0.0
        %1510 = vmatpush1.msra.mxu0 0.0
        %1511 = vmatprep.subr.mxu0 0.0
        %1512 = vmatpush1.msra.mxu0 0.0
        %1513 = vmatprep.mubr.f32.mxu0 0.0
        %1514 = vmatmul.mubr.f32.gmra.mrb[0].mxu0 %v1447
        %v1515 = vpop.f32.mrb[0].mxu0
        %v1516 = vadd.f32 0.0, %v1515
        %v1517 = vpop.f32.mrb[0].mxu0
        %1518 = vdwg.mxu0
        %v1520 = vsel %vm642, %v1516, 0
        %1522 = vmatprep.subr.mxu0 0.0
        %1523 = vmatpush1.msra.mxu0 %v426
        %1524 = vmatprep.subr.mxu0 0.0
        %1525 = vmatpush1.msra.mxu0 0.0
        %1526 = vmatprep.subr.mxu0 0.0
        %1527 = vmatpush1.msra.mxu0 0.0
        %1528 = vmatprep.subr.mxu0 0.0
        %1529 = vmatpush1.msra.mxu0 0.0
        %1530 = vmatprep.subr.mxu0 0.0
        %1531 = vmatpush1.msra.mxu0 0.0
        %1532 = vmatprep.subr.mxu0 0.0
        %1533 = vmatpush1.msra.mxu0 0.0
        %1534 = vmatprep.subr.mxu0 0.0
        %1535 = vmatpush1.msra.mxu0 0.0
        %1536 = vmatprep.subr.mxu0 0.0
        %1537 = vmatpush1.msra.mxu0 0.0
        %1538 = vmatprep.subr.mxu0 0.0
        %1539 = vmatpush1.msra.mxu0 0.0
        %1540 = vmatprep.subr.mxu0 0.0
        %1541 = vmatpush1.msra.mxu0 0.0
        %1542 = vmatprep.subr.mxu0 0.0
        %1543 = vmatpush1.msra.mxu0 0.0
        %1544 = vmatprep.subr.mxu0 0.0
        %1545 = vmatpush1.msra.mxu0 0.0
        %1546 = vmatprep.subr.mxu0 0.0
        %1547 = vmatpush1.msra.mxu0 0.0
        %1548 = vmatprep.subr.mxu0 0.0
        %1549 = vmatpush1.msra.mxu0 0.0
        %1550 = vmatprep.subr.mxu0 0.0
        %1551 = vmatpush1.msra.mxu0 0.0
        %1552 = vmatprep.subr.mxu0 0.0
        %1553 = vmatpush1.msra.mxu0 0.0
        %1554 = vmatprep.subr.mxu0 0.0
        %1555 = vmatpush1.msra.mxu0 0.0
        %1556 = vmatprep.subr.mxu0 0.0
        %1557 = vmatpush1.msra.mxu0 0.0
        %1558 = vmatprep.subr.mxu0 0.0
        %1559 = vmatpush1.msra.mxu0 0.0
        %1560 = vmatprep.subr.mxu0 0.0
        %1561 = vmatpush1.msra.mxu0 0.0
        %1562 = vmatprep.subr.mxu0 0.0
        %1563 = vmatpush1.msra.mxu0 0.0
        %1564 = vmatprep.subr.mxu0 0.0
        %1565 = vmatpush1.msra.mxu0 0.0
        %1566 = vmatprep.subr.mxu0 0.0
        %1567 = vmatpush1.msra.mxu0 0.0
        %1568 = vmatprep.subr.mxu0 0.0
        %1569 = vmatpush1.msra.mxu0 0.0
        %1570 = vmatprep.subr.mxu0 0.0
        %1571 = vmatpush1.msra.mxu0 0.0
        %1572 = vmatprep.subr.mxu0 0.0
        %1573 = vmatpush1.msra.mxu0 0.0
        %1574 = vmatprep.subr.mxu0 0.0
        %1575 = vmatpush1.msra.mxu0 0.0
        %1576 = vmatprep.subr.mxu0 0.0
        %1577 = vmatpush1.msra.mxu0 0.0
        %1578 = vmatprep.subr.mxu0 0.0
        %1579 = vmatpush1.msra.mxu0 0.0
        %1580 = vmatprep.subr.mxu0 0.0
        %1581 = vmatpush1.msra.mxu0 0.0
        %1582 = vmatprep.subr.mxu0 0.0
        %1583 = vmatpush1.msra.mxu0 0.0
        %1584 = vmatprep.subr.mxu0 0.0
        %1585 = vmatpush1.msra.mxu0 0.0
        %1586 = vmatprep.mubr.f32.mxu0 0.0
        %1587 = vmatmul.mubr.f32.gmra.mrb[0].mxu0 %v1520
        %v1588 = vpop.f32.mrb[0].mxu0
        %v1589 = vadd.f32 0.0, %v1588
        %v1590 = vpop.f32.mrb[0].mxu0
        %1591 = vdwg.mxu0
        %v1592 = vadd.f32 %v1353, %v1589
        %v1594 = vlaneseq
        %v1595 = vshrl.u32 %v1594, 7
        %v1596 = vsub.s32 0, %v1595
        %v1597 = vrot.slane %v427, %v1596
        %v1599 = vadd.f32 %v1592, %v1597
        %v1600 = vadd.f32 %v1599, %v379
        %1601 = vst.msk [vmem:[%s378] sm:$0xff] %vm382, %v1600
        %s1602 = sand.u32 %s208, 1
        %s1603 = scalar_lea.sflag [#allocation4], %s1602
        %s1604 = sand.u32 %s208, 1
        %s1605 = smul.addr %s1604, 8
        %s1606 = scalar_lea.vmem [#allocation11], %s1605
        // Predicated region
        $region73: #{tpu_custom_call.1} parent=51 // pred_check
          %p1607 = pneg %p218
        $region74: #{tpu_custom_call.1} parent=51 // pred_check_branch
          %1609 = sbr.rel (%p1607) target = $region76
        $region75: #{tpu_custom_call.1} parent=51 // pred_region
          %s1611 = ssub.s32 128, 128
          %1612 = vsyncadd %s1603, %s1611
          %s1613 = smul.addr %s27, 128
          %s1614 = scalar_lea.hbm %s8, %s1613
          %s1616 = sshll.u32 %s1606, 4
          %s1617 = int_to_ptr.vmem [resolvable:$true] %s1616
          %1619 = dma.vmem_to_hbm [thread:$0]  %s1617, 128, %s1614, %s1603
        $region76: #{tpu_custom_call.1} parent=51 // pred_fallthru
          _
      $region52: #{tpu_custom_call.1} parent=5 // pred_fallthru
        _
      %p1620 = scmp.le.s32.totalorder 2, %s22
      // Predicated region
      $region77: #{tpu_custom_call.1} parent=5 // pred_check
        %p1621 = pneg %p1620
      $region78: #{tpu_custom_call.1} parent=5 // pred_check_branch
        %1623 = sbr.rel (%p1621) target = $region80
      $region79: #{tpu_custom_call.1} parent=5 // pred_region
        %s1624 = ssub.s32 %s22, 2
        // Predicated region
        $region81: #{tpu_custom_call.1} parent=79 // pred_check
          %p1625 = pneg %p224
        $region82: #{tpu_custom_call.1} parent=79 // pred_check_branch
          %1627 = sbr.rel (%p1625) target = $region84
        $region83: #{tpu_custom_call.1} parent=79 // pred_region
          %s1628 = sand.u32 %s209, 1
          %s1629 = scalar_lea.sflag [#allocation4], %s1628
          %s1630 = sand.u32 %s209, 1
          %s1631 = smul.addr %s1630, 8
          %s1632 = scalar_lea.vmem [#allocation11], %s1631
          %1633 = dma.done %s1629, 128
        $region84: #{tpu_custom_call.1} parent=79 // pred_fallthru
          _
      $region80: #{tpu_custom_call.1} parent=5 // pred_fallthru
        _
    $region6: #{tpu_custom_call.1} parent=1 // loop_footer
      %s26 = sadd.s32 1, %s22
    $region7: #{tpu_custom_call.1} parent=1 // loop_footer_branch
      %21 = sbr.rel target = $region3
    $region8: #{tpu_custom_call.1} parent=1 // loop_exit
      _
    %1634 = vsyncpa [#allocation3], 1
    %s1635 = scalar_lea.sflag [#allocation3], 1
    %1636 = vsyncpa %s1635, 1
    %1637 = vsyncpa [#allocation6], 1
    %1638 = vsyncpa [#allocation9], 1
    %1639 = vsyncpa [#allocation4], 1
    %s1640 = scalar_lea.sflag [#allocation4], 1
    %1641 = vsyncpa %s1640, 1

</llo_original>
